<compile_context>
chip_gen: v5e
topology: v5e:2x2
jax: 0.10.0
libtpu: 0.0.40
codegen_flags: <defaults>
</compile_context>

<pallas_src>
import jax
import jax.numpy as jnp
from jax.experimental import pallas as pl
from jax.experimental.pallas import tpu as pltpu

SAMPLE_RATE = 16000
N_FFT = 400
HOP_LENGTH = 160
N_MELS = 80
F_MIN = 0.0
F_MAX = SAMPLE_RATE / 2.0
N_FREQS = N_FFT // 2 + 1          # 201 (onesided)
N_FREQS_PAD = 256                 # lane-aligned zero-padded frequency axis
K_DIM = 3 * HOP_LENGTH            # 480: 3 concatenated hops per frame (window zero past 400)
N_MELS_PAD = 128                  # lane-dense matmul output width (sliced back to 80)
AMIN = 1e-10                      # AmplitudeToDB amin; ref=1.0 -> db_multiplier term is 0


# ------------------------- plain-JAX parameter setup -------------------------

def _hz_to_mel_htk(f):
    return 2595.0 * jnp.log10(1.0 + f / 700.0)


def _mel_to_hz_htk(m):
    return 700.0 * (jnp.power(10.0, m / 2595.0) - 1.0)


def _mel_filterbank():
    """torchaudio melscale_fbanks defaults (mel_scale='htk', norm=None) -> [201, 80] f32."""
    all_freqs = jnp.linspace(0.0, SAMPLE_RATE / 2.0, N_FREQS)
    m_min = _hz_to_mel_htk(jnp.float32(F_MIN))
    m_max = _hz_to_mel_htk(jnp.float32(F_MAX))
    m_pts = jnp.linspace(m_min, m_max, N_MELS + 2)
    f_pts = _mel_to_hz_htk(m_pts)
    f_diff = f_pts[1:] - f_pts[:-1]                      # (n_mels+1,)
    slopes = f_pts[None, :] - all_freqs[:, None]         # (n_freqs, n_mels+2)
    down = -slopes[:, :-2] / f_diff[:-1]
    up = slopes[:, 2:] / f_diff[1:]
    return jnp.maximum(0.0, jnp.minimum(down, up)).astype(jnp.float32)


def make_mel_fb2():
    """Zero-padded [256,128] filterbank duplicated along freq -> [512,128] f32.

    (re^2 | im^2) @ [fb; fb] == (re^2 + im^2) @ fb, so no re/im slicing is needed in-kernel.
    """
    fb = jnp.pad(_mel_filterbank(),
                 ((0, N_FREQS_PAD - N_FREQS), (0, N_MELS_PAD - N_MELS)))      # [256, 128]
    return jnp.concatenate([fb, fb], axis=0).astype(jnp.float32)              # [512, 128]


def make_windowed_dft():
    """[480, 512] bf16 = [window*cos | window*(-sin)]; rows >= 400 and freq cols >= 201 zero."""
    n = jnp.arange(N_FFT, dtype=jnp.float32)
    k = jnp.arange(N_FREQS, dtype=jnp.float32)
    ang = 2.0 * jnp.pi * n[:, None] * k[None, :] / N_FFT
    window = 0.5 * (1.0 - jnp.cos(2.0 * jnp.pi * n / N_FFT))   # periodic Hann
    cos_w = window[:, None] * jnp.cos(ang)
    sin_w = window[:, None] * (-jnp.sin(ang))
    cos_p = jnp.pad(cos_w, ((0, K_DIM - N_FFT), (0, N_FREQS_PAD - N_FREQS)))
    sin_p = jnp.pad(sin_w, ((0, K_DIM - N_FFT), (0, N_FREQS_PAD - N_FREQS)))
    return jnp.concatenate([cos_p, sin_p], axis=1).astype(jnp.bfloat16)       # [480, 512]


# ------------------------------ Pallas kernel --------------------------------

def melspec_kernel(x_ref, dft_ref, fb2_ref, o_ref):
    # x:   [FT, 480] bf16  raw frames (3 concatenated 160-sample hops; window folded into dft)
    # dft: [480, 512] bf16 = [win*cos | win*(-sin)]
    # fb2: [512, 128] f32  duplicated mel filterbank
    # o:   [128, FT]  f32  transposed log-mel tile (lane-dense: FT is a multiple of 128)
    reim = jnp.dot(x_ref[...], dft_ref[...], preferred_element_type=jnp.float32)   # [FT, 512]
    mel = jnp.dot(reim * reim, fb2_ref[...], preferred_element_type=jnp.float32)   # [FT, 128]
    db = 10.0 * jnp.log10(jnp.maximum(mel, AMIN))   # AmplitudeToDB(power, ref=1, top_db=None)
    o_ref[...] = db.T                               # XLU transpose; store stays lane-dense


# --------------------------------- wrapper -----------------------------------

def _pick_frame_tile(total_frames: int) -> int:
    # Bigger tiles amortize the ~0.35us/step pipeline overhead, but keep >= 2 grid steps
    # for short clips so both v7x TensorCores get work on the "parallel" axis.
    for ft in (512, 256, 128):
        if pl.cdiv(total_frames, ft) >= 2:
            return ft
    return 128


def _build_frames(waveform):
    """Gather-free framing: [C, T] -> ([C*F, 480] bf16 frames, channels, num_frames)."""
    channels, num_samples = waveform.shape
    pad = N_FFT // 2                                   # center=True reflect pad (torch.stft)
    padded = jnp.pad(waveform.astype(jnp.float32), ((0, 0), (pad, pad)), mode="reflect")
    num_frames = 1 + num_samples // HOP_LENGTH
    num_hops = num_frames + 2
    needed = num_hops * HOP_LENGTH
    cur = padded.shape[1]
    if cur < needed:                                   # static shapes -> Python branch
        padded = jnp.pad(padded, ((0, 0), (0, needed - cur)))
    else:
        padded = padded[:, :needed]                    # trailing samples past last frame unused
    hops = padded.astype(jnp.bfloat16).reshape(channels, num_hops, HOP_LENGTH)
    # frame f = padded[f*hop : f*hop+480] = hops[f] ++ hops[f+1] ++ hops[f+2]; the extra half
    # hop (samples 400..479) multiplies zero rows of the windowed DFT, so it is neutral.
    frames = jnp.concatenate([hops[:, :-2], hops[:, 1:-1], hops[:, 2:]], axis=-1)  # [C, F, 480]
    return frames.reshape(channels * num_frames, K_DIM), channels, num_frames


@jax.jit
def mel_spectrogram_extractor(waveform):
    """Equivalent of MelSpectrogramExtractor.forward. Returns [C, n_mels, frames]."""
    if waveform.ndim == 1:
        waveform = waveform[None, :]
    x, channels, num_frames = _build_frames(waveform)   # [total, 480] bf16
    total = channels * num_frames

    dft = make_windowed_dft()                            # [480, 512] bf16
    fb2 = make_mel_fb2()                                 # [512, 128] f32

    ft = _pick_frame_tile(total)
    num_tiles = pl.cdiv(total, ft)                       # ragged last tile: masked edge block

    out = pl.pallas_call(
        melspec_kernel,
        out_shape=jax.ShapeDtypeStruct((N_MELS_PAD, total), jnp.float32),
        grid_spec=pltpu.PrefetchScalarGridSpec(
            num_scalar_prefetch=0,
            grid=(num_tiles,),
            in_specs=[
                pl.BlockSpec((ft, K_DIM), lambda i: (i, 0)),
                # constant blocks: same block index every step -> fetched once by the pipeline
                pl.BlockSpec((K_DIM, 2 * N_FREQS_PAD), lambda i: (0, 0)),
                pl.BlockSpec((2 * N_FREQS_PAD, N_MELS_PAD), lambda i: (0, 0)),
            ],
            out_specs=pl.BlockSpec((N_MELS_PAD, ft), lambda i: (0, i)),
        ),
        compiler_params=pltpu.CompilerParams(dimension_semantics=("parallel",)),
    )(x, dft, fb2)

    # Slice mel padding and un-flatten channels; padded/garbage tile rows never reach here.
    log_mel = out[:N_MELS].reshape(N_MELS, channels, num_frames)
    return jnp.transpose(log_mel, (1, 0, 2))             # [C, n_mels, frames]


# ------------------------------ validation refs ------------------------------

def _same_math_xla(x, channels, num_frames):
    """Same bf16 frames/matrices as the kernel, computed with plain XLA matmuls."""
    reim = jnp.dot(x, make_windowed_dft(), preferred_element_type=jnp.float32)
    mel = jnp.dot(reim * reim, make_mel_fb2(), preferred_element_type=jnp.float32,
                  precision=jax.lax.Precision.HIGHEST)
    db = 10.0 * jnp.log10(jnp.maximum(mel, AMIN))[:, :N_MELS]
    return jnp.transpose(db.reshape(channels, num_frames, N_MELS), (0, 2, 1))


def _reference_log_mel(waveform):
    """Plain-XLA float32 reference (explicit windowed DFT), torchaudio defaults."""
    if waveform.ndim == 1:
        waveform = waveform[None, :]
    num_samples = waveform.shape[1]
    pad = N_FFT // 2
    padded = jnp.pad(waveform.astype(jnp.float32), ((0, 0), (pad, pad)), mode="reflect")
    num_frames = 1 + num_samples // HOP_LENGTH
    idx = jnp.arange(num_frames)[:, None] * HOP_LENGTH + jnp.arange(N_FFT)[None, :]
    frames = padded[:, idx]                                            # [C, F, 400]
    n = jnp.arange(N_FFT, dtype=jnp.float32)
    k = jnp.arange(N_FREQS, dtype=jnp.float32)
    ang = 2.0 * jnp.pi * n[:, None] * k[None, :] / N_FFT
    window = 0.5 * (1.0 - jnp.cos(2.0 * jnp.pi * n / N_FFT))
    wf = frames * window
    hi = jax.lax.Precision.HIGHEST
    re = jnp.einsum("cfn,nk->cfk", wf, jnp.cos(ang), precision=hi)
    im = jnp.einsum("cfn,nk->cfk", wf, -jnp.sin(ang), precision=hi)
    mel = jnp.einsum("cfk,km->cfm", re * re + im * im, _mel_filterbank(), precision=hi)
    db = 10.0 * jnp.log10(jnp.maximum(mel, AMIN))
    return jnp.transpose(db, (0, 2, 1))                                # [C, 80, F]


if __name__ == "__main__":
    key = jax.random.PRNGKey(0)
    num_samples = 32000                      # 2 s @ 16 kHz -> 201 frames -> grid of 2 tiles
    waveform = jax.random.normal(key, (num_samples,), dtype=jnp.float32)

    log_mel = mel_spectrogram_extractor(waveform)
    jax.block_until_ready(log_mel)

    expected_frames = 1 + num_samples // HOP_LENGTH
    assert log_mel.shape == (1, N_MELS, expected_frames), log_mel.shape
    assert log_mel.dtype == jnp.float32
    assert bool(jnp.all(jnp.isfinite(log_mel)))

    # Kernel vs identical-math XLA (tight: catches BlockSpec / grid / transpose bugs).
    x_dbg, c_dbg, f_dbg = _build_frames(waveform[None, :])
    same = _same_math_xla(x_dbg, c_dbg, f_dbg)
    err_same = float(jnp.max(jnp.abs(log_mel - same)))
    assert err_same < 0.3, f"kernel vs same-math XLA max |diff| = {err_same} dB"

    # Kernel vs float32 STFT reference (mean check: robust to bf16 tails on tiny bins).
    ref = _reference_log_mel(waveform)
    err_ref = float(jnp.mean(jnp.abs(log_mel - ref)))
    assert err_ref < 0.2, f"kernel vs f32 reference mean |diff| = {err_ref} dB"

    print("KERNEL_OK")
</pallas_src>

<mosaic_0001>
module attributes {stable_mosaic.version = 11 : i64} {
  func.func @melspec_kernel(%arg0: i32, %arg1: memref<128x480xbf16, #tpu.memory_space<vmem>>, %arg2: memref<480x512xbf16, #tpu.memory_space<vmem>>, %arg3: memref<512x128xf32, #tpu.memory_space<vmem>>, %arg4: memref<128x128xf32, #tpu.memory_space<vmem>>) attributes {dimension_semantics = [#tpu.dimension_semantics<parallel>], iteration_bounds = array<i64: 2>, scalar_prefetch = 0 : i64, scratch_operands = 0 : i64, tpu.core_type = #tpu.core_type<tc>, window_params = [{transform_indices = @transform_0, window_bounds = array<i64: 128, 480>}, {pipeline_mode = #tpu.pipeline_mode<synchronous>, transform_indices = @transform_1, window_bounds = array<i64: 480, 512>}, {pipeline_mode = #tpu.pipeline_mode<synchronous>, transform_indices = @transform_2, window_bounds = array<i64: 512, 128>}, {transform_indices = @transform_3, window_bounds = array<i64: 128, 128>}]} {
    %c0 = arith.constant 0 : index
    %c0_0 = arith.constant 0 : index
    %0 = vector.load %arg1[%c0, %c0_0] : memref<128x480xbf16, #tpu.memory_space<vmem>>, vector<128x480xbf16>
    %c0_1 = arith.constant 0 : index
    %c0_2 = arith.constant 0 : index
    %1 = vector.load %arg2[%c0_1, %c0_2] : memref<480x512xbf16, #tpu.memory_space<vmem>>, vector<480x512xbf16>
    %cst = arith.constant dense<0.000000e+00> : vector<128x512xf32>
    %2 = tpu.matmul %0, %1, %cst {dimension_numbers = #tpu.dot_dimension_numbers<[1], [0], [0], [1], [0, 0, 1, 1], [], []>} : vector<128x480xbf16>, vector<480x512xbf16>, vector<128x512xf32> -> vector<128x512xf32>
    %3 = arith.mulf %2, %2 : vector<128x512xf32>
    %c0_3 = arith.constant 0 : index
    %c0_4 = arith.constant 0 : index
    %4 = vector.load %arg3[%c0_3, %c0_4] : memref<512x128xf32, #tpu.memory_space<vmem>>, vector<512x128xf32>
    %cst_5 = arith.constant dense<0.000000e+00> : vector<128x128xf32>
    %5 = tpu.matmul %3, %4, %cst_5 {dimension_numbers = #tpu.dot_dimension_numbers<[1], [0], [0], [1], [0, 0, 1, 1], [], []>} : vector<128x512xf32>, vector<512x128xf32>, vector<128x128xf32> -> vector<128x128xf32>
    %cst_6 = arith.constant 1.000000e-10 : f32
    %6 = vector.broadcast %cst_6 : f32 to vector<128x128xf32>
    %7 = arith.maximumf %5, %6 : vector<128x128xf32>
    %8 = math.log %7 : vector<128x128xf32>
    %cst_7 = arith.constant 0.434294492 : f32
    %9 = vector.broadcast %cst_7 : f32 to vector<128x128xf32>
    %10 = arith.mulf %8, %9 : vector<128x128xf32>
    %cst_8 = arith.constant 1.000000e+01 : f32
    %11 = vector.broadcast %cst_8 : f32 to vector<128x128xf32>
    %12 = arith.mulf %11, %10 : vector<128x128xf32>
    %13 = tpu.transpose %12, [1, 0] : vector<128x128xf32> -> vector<128x128xf32>
    %c0_9 = arith.constant 0 : index
    %c0_10 = arith.constant 0 : index
    %14 = vector.load %arg4[%c0_9, %c0_10] : memref<128x128xf32, #tpu.memory_space<vmem>>, vector<128x128xf32>
    tpu.vector_store %arg4[%c0_9, %c0_10], %13 {strides = array<i32>} : memref<128x128xf32, #tpu.memory_space<vmem>>, vector<128x128xf32>,
    return
  }
  func.func @transform_0(%arg0: i32) -> (i32, i32) {
    %c0_i32 = arith.constant 0 : i32
    %c0_i32_0 = arith.constant 0 : i32
    return %arg0, %c0_i32 : i32, i32
  }
  func.func @transform_1(%arg0: i32) -> (i32, i32) {
    %c0_i32 = arith.constant 0 : i32
    %c0_i32_0 = arith.constant 0 : i32
    %c0_i32_1 = arith.constant 0 : i32
    return %c0_i32, %c0_i32_0 : i32, i32
  }
  func.func @transform_2(%arg0: i32) -> (i32, i32) {
    %c0_i32 = arith.constant 0 : i32
    %c0_i32_0 = arith.constant 0 : i32
    %c0_i32_1 = arith.constant 0 : i32
    return %c0_i32, %c0_i32_0 : i32, i32
  }
  func.func @transform_3(%arg0: i32) -> (i32, i32) {
    %c0_i32 = arith.constant 0 : i32
    %c0_i32_0 = arith.constant 0 : i32
    return %c0_i32, %arg0 : i32, i32
  }
}

</mosaic_0001>

<llo_original>
// kernel: reverse
$region0: #{reverse}
  %s0 = inlined_call_operand.vmem [shape: bf16[1,256], index: 0, kind: input, shape index: {}]
  %s1 = inlined_call_operand.vmem [shape: bf16[1,256], index: 1, kind: output, shape index: {}]
  %v2 = vlaneseq
  %v3 = vsub.s32 127, %v2
  %4 = vset.pattern.permute.xlu0 %v3
  $region1: #{reverse} parent=0
    #allocation0 [shape = 'u8[4096]{0}', space=vmem, size = 0x1000, scoped, tag = 'operand span for operand 0']
    #allocation1 [shape = 'u8[1024]{0}', space=vmem, size = 0x400, scoped, tag = 'packed  for operand 0']
    #allocation2 [shape = 'u8[4096]{0}', space=vmem, size = 0x1000, scoped, tag = 'operand span for operand 1']
    #allocation3 [shape = 'u8[1024]{0}', space=vmem, size = 0x400, scoped, tag = 'packed  for operand 1']
    loop: start=0, step=1, limit=4
    $region2: #{reverse} parent=1 // loop_pre_header
      _
    $region3: #{reverse} parent=1 // loop_header
      %s6 = sphi 0, %s10
      %p7 = scmp.ge.s32.totalorder %s6, 4
      %s13 = sphi 0, %s25
      %s14 = sphi 0, %s21
      %s15 = sphi 0, %s13
      %s16 = sphi 0, %s14
      %s17 = sphi 0, %s15
      %s18 = sphi 0, %s16
    $region4: #{reverse} parent=1 // loop_header_branch
      %9 = sbr.rel (%p7) target = $region8
    $region5: #{reverse} parent=1 // loop_body
      %s11 = ssub.s32 %s6, 1
      %s12 = ssub.s32 %s6, 2
      %s19 = sadd.s32 1, %s14
      %p20 = scmp.ge.s32.totalorder %s19, 2
      %s21 = scalar_select %p20, 0, %s19
      %s22 = sadd.s32 1, %s13
      %s23 = scalar_select %p20, %s22, %s13
      %p24 = scmp.ge.s32.totalorder %s23, 1
      %s25 = scalar_select %p24, 0, %s23
      %p26 = scmp.le.s32.totalorder 1, %s6
      %p27 = scmp.lt.s32.totalorder %s6, 3
      %p28 = pnand %p26, %p27
      %p29 = pneg %p28
      // Predicated region
      $region9: #{reverse} parent=5 // pred_check
        _
      $region10: #{reverse} parent=5 // pred_check_branch
        %31 = sbr.rel (%p28) target = $region12
      $region11: #{reverse} parent=5 // pred_region
        %s32 = ssub.s32 %s6, 1
      $region12: #{reverse} parent=5 // pred_fallthru
        _
      %p33 = scmp.lt.s32.totalorder %s6, 2
      // Predicated region
      $region13: #{reverse} parent=5 // pred_check
        %p34 = pneg %p33
      $region14: #{reverse} parent=5 // pred_check_branch
        %36 = sbr.rel (%p34) target = $region16
      $region15: #{reverse} parent=5 // pred_region
        %s37 = sand.u32 %s6, 1
        %s38 = sand.u32 %s6, 1
        %s39 = scalar_lea.vmem [#allocation1], %s38
        %s40 = ssub.s32 1, %s14
        %s41 = smul.addr %s13, 2
        %s42 = sadd.s32 %s40, %s41
        %s43 = scalar_lea.vmem %s0, %s42
        // Predicated region
        $region17: #{reverse} parent=15 // pred_check
          _
        $region18: #{reverse} parent=15 // pred_check_branch
          %45 = sbr.rel (0) target = $region20
        $region19: #{reverse} parent=15 // pred_region
          // Predicated region
          $region21: #{reverse} parent=19 // pred_check
            _
          $region22: #{reverse} parent=19 // pred_check_branch
            %47 = sbr.rel target = $region24
          $region23: #{reverse} parent=19 // pred_region
            // Predicated region
            $region36: #{reverse} parent=23 // pred_check
              _
            $region37: #{reverse} parent=23 // pred_check_branch
              %63 = sbr.rel (0) target = $region39
            $region38: #{reverse} parent=23 // pred_region
              %s65 = ssub.s32 2, 1
              loop: start=0, step=1, limit=1
              $region40: #{reverse} parent=38 // loop_pre_header
                _
              $region41: #{reverse} parent=38 // loop_header
                %s67 = sphi 0, %s71
                %p68 = scmp.ge.s32.totalorder %s67, 1
                %s72 = sphi %s43, %s43
                %s73 = sphi %s39, %s39
              $region42: #{reverse} parent=38 // loop_header_branch
                %70 = sbr.rel (%p68) target = $region46
              $region43: #{reverse} parent=38 // loop_body
                %v74 = vld [vmem:[%s72] sm:%s65]
                %75 = vst [vmem:[%s73] sm:%s65] %v74
              $region44: #{reverse} parent=38 // loop_footer
                %s71 = sadd.s32 1, %s67
              $region45: #{reverse} parent=38 // loop_footer_branch
                %66 = sbr.rel target = $region41
              $region46: #{reverse} parent=38 // loop_exit
                _
            $region39: #{reverse} parent=23 // pred_fallthru
              _
          $region24: #{reverse} parent=19 // pred_fallthru
            _
          // Predicated region
          $region25: #{reverse} parent=19 // pred_check
            _
          $region26: #{reverse} parent=19 // pred_check_branch
            %49 = sbr.rel (0) target = $region28
          $region27: #{reverse} parent=19 // pred_region
            %s51 = ssub.s32 2, 1
            loop: start=0, step=1, limit=1
            $region29: #{reverse} parent=27 // loop_pre_header
              _
            $region30: #{reverse} parent=27 // loop_header
              %s53 = sphi 0, %s57
              %p54 = scmp.ge.s32.totalorder %s53, 1
              %s58 = sphi %s43, %s43
              %s59 = sphi %s39, %s39
            $region31: #{reverse} parent=27 // loop_header_branch
              %56 = sbr.rel (%p54) target = $region35
            $region32: #{reverse} parent=27 // loop_body
              %v60 = vld [vmem:[%s58] sm:%s51]
              %61 = vst [vmem:[%s59] sm:%s51] %v60
            $region33: #{reverse} parent=27 // loop_footer
              %s57 = sadd.s32 1, %s53
            $region34: #{reverse} parent=27 // loop_footer_branch
              %52 = sbr.rel target = $region30
            $region35: #{reverse} parent=27 // loop_exit
              _
          $region28: #{reverse} parent=19 // pred_fallthru
            _
        $region20: #{reverse} parent=15 // pred_fallthru
          _
        %76 = vnop
      $region16: #{reverse} parent=5 // pred_fallthru
        _
      %p77 = scmp.le.s32.totalorder 1, %s6
      %p78 = scmp.lt.s32.totalorder %s6, 3
      %p79 = pnand %p77, %p78
      %p80 = pneg %p79
      // Predicated region
      $region47: #{reverse} parent=5 // pred_check
        _
      $region48: #{reverse} parent=5 // pred_check_branch
        %82 = sbr.rel (%p79) target = $region50
      $region49: #{reverse} parent=5 // pred_region
        %s83 = ssub.s32 %s6, 1
        %s84 = sand.u32 %s11, 1
        %s85 = sand.u32 %s11, 1
        %s86 = scalar_lea.vmem [#allocation1], %s85
        %s87 = sand.u32 %s11, 1
        %s88 = sand.u32 %s11, 1
        %s89 = scalar_lea.vmem [#allocation1], %s88
        %s90 = sand.u32 %s11, 1
        %s91 = sand.u32 %s11, 1
        %s92 = scalar_lea.vmem [#allocation3], %s91
        %s94 = ssub.s32 4, 1
        %s95 = sshrl.u32 %s94, 1
        %s96 = sor.u32 %s94, %s95
        %s97 = sand.u32 %s96, 85
        %s98 = sshrl.u32 %s97, 1
        %s99 = sor.u32 %s97, %s98
        %s100 = sand.u32 51, %s99
        %s101 = sshrl.u32 %s100, 2
        %s102 = sor.u32 %s100, %s101
        %s103 = sand.u32 15, %s102
        %v104 = vld [vmem:[%s89] sm:%s103]
        %v105 = vunpack.c.l.bf16 %v104
        %v106 = vunpack.c.h.bf16 %v104
        %107 = vst [vmem:[#allocation0] sm:%s94] %v105
        %s108 = ssub.s32 1, %s16
        %v109 = vld [vmem:[#allocation0] sm:$0xff]
        %110 = vperm.xlu0 %4, %v109
        %v111 = vpop.permute.xlu0 %110
        %112 = vst [vmem:[#allocation2] sm:$0xff] %v111
        %s114 = ssub.s32 4, 1
        %v115 = vld [vmem:[#allocation2] sm:%s114]
        %v116 = vpack.c.bf16 0.0, %v115
        %s118 = ssub.s32 2, 1
        %119 = vst [vmem:[%s92] sm:%s118] %v116
        %s120 = sand.u32 %s11, 1
        %s121 = sand.u32 %s11, 1
        %s122 = scalar_lea.vmem [#allocation3], %s121
        %s123 = smul.addr %s15, 2
        %s124 = sadd.s32 %s16, %s123
        %s125 = scalar_lea.vmem %s1, %s124
        // Predicated region
        $region51: #{reverse} parent=49 // pred_check
          _
        $region52: #{reverse} parent=49 // pred_check_branch
          %127 = sbr.rel (0) target = $region54
        $region53: #{reverse} parent=49 // pred_region
          // Predicated region
          $region55: #{reverse} parent=53 // pred_check
            _
          $region56: #{reverse} parent=53 // pred_check_branch
            %129 = sbr.rel target = $region58
          $region57: #{reverse} parent=53 // pred_region
            // Predicated region
            $region70: #{reverse} parent=57 // pred_check
              _
            $region71: #{reverse} parent=57 // pred_check_branch
              %145 = sbr.rel (0) target = $region73
            $region72: #{reverse} parent=57 // pred_region
              %s147 = ssub.s32 2, 1
              loop: start=0, step=1, limit=1
              $region74: #{reverse} parent=72 // loop_pre_header
                _
              $region75: #{reverse} parent=72 // loop_header
                %s149 = sphi 0, %s153
                %p150 = scmp.ge.s32.totalorder %s149, 1
                %s154 = sphi %s122, %s122
                %s155 = sphi %s125, %s125
              $region76: #{reverse} parent=72 // loop_header_branch
                %152 = sbr.rel (%p150) target = $region80
              $region77: #{reverse} parent=72 // loop_body
                %v156 = vld [vmem:[%s154] sm:%s147]
                %157 = vst [vmem:[%s155] sm:%s147] %v156
              $region78: #{reverse} parent=72 // loop_footer
                %s153 = sadd.s32 1, %s149
              $region79: #{reverse} parent=72 // loop_footer_branch
                %148 = sbr.rel target = $region75
              $region80: #{reverse} parent=72 // loop_exit
                _
            $region73: #{reverse} parent=57 // pred_fallthru
              _
          $region58: #{reverse} parent=53 // pred_fallthru
            _
          // Predicated region
          $region59: #{reverse} parent=53 // pred_check
            _
          $region60: #{reverse} parent=53 // pred_check_branch
            %131 = sbr.rel (0) target = $region62
          $region61: #{reverse} parent=53 // pred_region
            %s133 = ssub.s32 2, 1
            loop: start=0, step=1, limit=1
            $region63: #{reverse} parent=61 // loop_pre_header
              _
            $region64: #{reverse} parent=61 // loop_header
              %s135 = sphi 0, %s139
              %p136 = scmp.ge.s32.totalorder %s135, 1
              %s140 = sphi %s122, %s122
              %s141 = sphi %s125, %s125
            $region65: #{reverse} parent=61 // loop_header_branch
              %138 = sbr.rel (%p136) target = $region69
            $region66: #{reverse} parent=61 // loop_body
              %v142 = vld [vmem:[%s140] sm:%s133]
              %143 = vst [vmem:[%s141] sm:%s133] %v142
            $region67: #{reverse} parent=61 // loop_footer
              %s139 = sadd.s32 1, %s135
            $region68: #{reverse} parent=61 // loop_footer_branch
              %134 = sbr.rel target = $region64
            $region69: #{reverse} parent=61 // loop_exit
              _
          $region62: #{reverse} parent=53 // pred_fallthru
            _
        $region54: #{reverse} parent=49 // pred_fallthru
          _
        %158 = vnop
      $region50: #{reverse} parent=5 // pred_fallthru
        _
      %p159 = scmp.le.s32.totalorder 2, %s6
      // Predicated region
      $region81: #{reverse} parent=5 // pred_check
        %p160 = pneg %p159
      $region82: #{reverse} parent=5 // pred_check_branch
        %162 = sbr.rel (%p160) target = $region84
      $region83: #{reverse} parent=5 // pred_region
        %s163 = ssub.s32 %s6, 2
        %s164 = sand.u32 %s12, 1
        %s165 = sand.u32 %s12, 1
        %s166 = scalar_lea.vmem [#allocation3], %s165
      $region84: #{reverse} parent=5 // pred_fallthru
        _
    $region6: #{reverse} parent=1 // loop_footer
      %s10 = sadd.s32 1, %s6
    $region7: #{reverse} parent=1 // loop_footer_branch
      %5 = sbr.rel target = $region3
    $region8: #{reverse} parent=1 // loop_exit
      _

// kernel: mel_spectrogram_extractor.1
$region0: #{mel_spectrogram_extractor.1}
  #allocation0 [shape = 'u32[]', space=smem, size = 0x4, offset = 0x4, fixed_abs, tag = 'smem constant byte address 0x4 - core index']
  #allocation1 [shape = 'u32[72,128]{1,0:T(1,128)}', space=vmem, size = 0x9000, scoped, tag = 'internal scratch']
  %s0 = inlined_call_operand.vmem [shape: bf16[201,480], index: 0, kind: input, shape index: {}]
  %s1 = inlined_call_operand.vmem [shape: bf16[480,512], index: 1, kind: input, shape index: {}]
  %s2 = inlined_call_operand.vmem [shape: f32[512,128], index: 2, kind: input, shape index: {}]
  %s3 = inlined_call_operand.vmem [shape: f32[128,201], index: 3, kind: output, shape index: {}]
  %s4 = sld [smem:[#allocation0]]
  $region79: #{mel_spectrogram_extractor.1} parent=0
    _
  %s6 = ssub.s32 1, %s4
  %s7 = scalar_select 0, %s6, %s4
  $region1: #{mel_spectrogram_extractor.1} parent=0
    #allocation2 [shape = 'u8[131072]{0}', space=vmem, size = 0x20000, scoped, tag = 'output window, operand 0']
    loop: start=0, step=1, limit=4
    $region2: #{mel_spectrogram_extractor.1} parent=1 // loop_pre_header
      _
    $region3: #{mel_spectrogram_extractor.1} parent=1 // loop_header
      %s9 = sphi 0, %s13
      %p10 = scmp.ge.s32.totalorder %s9, 4
      %s19 = sphi 0, %s21
      %s22 = sphi 0, %s19
      %s23 = sphi 0, %s22
      %s39 = sphi 0, %s23
      %s43 = sphi 0, %s43
      %s45 = sphi 0, %s43
      %s46 = sphi 0, %s45
      %s60 = sphi 0, %s46
      %s64 = sphi 0, %s64
      %s66 = sphi 0, %s64
      %s67 = sphi 0, %s66
      %s81 = sphi 0, %s67
      %s87 = sphi 0, %s89
      %s90 = sphi 0, %s87
      %s91 = sphi 0, %s90
      %s107 = sphi 0, %s91
    $region4: #{mel_spectrogram_extractor.1} parent=1 // loop_header_branch
      %12 = sbr.rel (%p10) target = $region8
    $region5: #{mel_spectrogram_extractor.1} parent=1 // loop_body
      %s14 = ssub.s32 %s9, 1
      %s15 = ssub.s32 %s9, 2
      %s16 = sadd.s32 %s9, 1
      %s17 = ssub.s32 %s9, %s16
      %p18 = scmp.eq.s32.totalorder %s17, 0
      %s20 = sadd.s32 %s19, 1
      %s21 = scalar_select %p18, %s19, %s20
      %p24 = pneg %p18
      %p25 = scmp.eq.s32.totalorder %s9, 1
      %p26 = por %p24, %p25
      %p27 = scmp.ne.s32.totalorder %s19, %s22
      %p28 = scmp.eq.s32.totalorder %s9, 0
      %p29 = por %p27, %p28
      %p30 = scmp.ne.s32.totalorder %s19, %s22
      %p31 = scmp.eq.s32.totalorder %s14, 1
      %p32 = por %p30, %p31
      %p33 = scmp.ne.s32.totalorder %s22, %s23
      %p34 = scmp.eq.s32.totalorder %s14, 0
      %p35 = por %p33, %p34
      %p36 = scmp.ne.s32.totalorder %s22, %s23
      %p37 = scmp.eq.s32.totalorder %s15, 1
      %p38 = por %p36, %p37
      %p40 = scmp.ne.s32.totalorder %s23, %s39
      %p41 = scmp.eq.s32.totalorder %s15, 0
      %p42 = por %p40, %p41
      %s44 = sadd.s32 %s43, 1
      %p47 = scmp.eq.s32.totalorder %s9, 1
      %p48 = scmp.ne.s32.totalorder %s43, %s45
      %p49 = scmp.eq.s32.totalorder %s9, 0
      %p50 = por %p48, %p49
      %p51 = scmp.ne.s32.totalorder %s43, %s45
      %p52 = scmp.eq.s32.totalorder %s14, 1
      %p53 = por %p51, %p52
      %p54 = scmp.ne.s32.totalorder %s45, %s46
      %p55 = scmp.eq.s32.totalorder %s14, 0
      %p56 = por %p54, %p55
      %p57 = scmp.ne.s32.totalorder %s45, %s46
      %p58 = scmp.eq.s32.totalorder %s15, 1
      %p59 = por %p57, %p58
      %p61 = scmp.ne.s32.totalorder %s46, %s60
      %p62 = scmp.eq.s32.totalorder %s15, 0
      %p63 = por %p61, %p62
      %s65 = sadd.s32 %s64, 1
      %p68 = scmp.eq.s32.totalorder %s9, 1
      %p69 = scmp.ne.s32.totalorder %s64, %s66
      %p70 = scmp.eq.s32.totalorder %s9, 0
      %p71 = por %p69, %p70
      %p72 = scmp.ne.s32.totalorder %s64, %s66
      %p73 = scmp.eq.s32.totalorder %s14, 1
      %p74 = por %p72, %p73
      %p75 = scmp.ne.s32.totalorder %s66, %s67
      %p76 = scmp.eq.s32.totalorder %s14, 0
      %p77 = por %p75, %p76
      %p78 = scmp.ne.s32.totalorder %s66, %s67
      %p79 = scmp.eq.s32.totalorder %s15, 1
      %p80 = por %p78, %p79
      %p82 = scmp.ne.s32.totalorder %s67, %s81
      %p83 = scmp.eq.s32.totalorder %s15, 0
      %p84 = por %p82, %p83
      %s85 = ssub.s32 %s9, %s16
      %p86 = scmp.eq.s32.totalorder %s85, 0
      %s88 = sadd.s32 %s87, 1
      %s89 = scalar_select %p86, %s87, %s88
      %p92 = pneg %p86
      %p93 = scmp.eq.s32.totalorder %s9, 1
      %p94 = por %p92, %p93
      %p95 = scmp.ne.s32.totalorder %s87, %s90
      %p96 = scmp.eq.s32.totalorder %s9, 0
      %p97 = por %p95, %p96
      %p98 = scmp.ne.s32.totalorder %s87, %s90
      %p99 = scmp.eq.s32.totalorder %s14, 1
      %p100 = por %p98, %p99
      %p101 = scmp.ne.s32.totalorder %s90, %s91
      %p102 = scmp.eq.s32.totalorder %s14, 0
      %p103 = por %p101, %p102
      %p104 = scmp.ne.s32.totalorder %s90, %s91
      %p105 = scmp.eq.s32.totalorder %s15, 1
      %p106 = por %p104, %p105
      %p108 = scmp.ne.s32.totalorder %s91, %s107
      %p109 = scmp.eq.s32.totalorder %s15, 0
      %p110 = por %p108, %p109
      %p111 = scmp.le.s32.totalorder 1, %s9
      %p112 = scmp.lt.s32.totalorder %s9, 3
      %p113 = pnand %p111, %p112
      %p114 = pneg %p113
      // Predicated region
      $region9: #{mel_spectrogram_extractor.1} parent=5 // pred_check
        _
      $region10: #{mel_spectrogram_extractor.1} parent=5 // pred_check_branch
        %116 = sbr.rel (%p113) target = $region12
      $region11: #{mel_spectrogram_extractor.1} parent=5 // pred_region
        %s117 = ssub.s32 %s9, 1
        // Predicated region
        $region13: #{mel_spectrogram_extractor.1} parent=11 // pred_check
          %p118 = pneg %p56
        $region14: #{mel_spectrogram_extractor.1} parent=11 // pred_check_branch
          %120 = sbr.rel (%p118) target = $region16
        $region15: #{mel_spectrogram_extractor.1} parent=11 // pred_region
          _
        $region16: #{mel_spectrogram_extractor.1} parent=11 // pred_fallthru
          _
        // Predicated region
        $region17: #{mel_spectrogram_extractor.1} parent=11 // pred_check
          %p121 = pneg %p77
        $region18: #{mel_spectrogram_extractor.1} parent=11 // pred_check_branch
          %123 = sbr.rel (%p121) target = $region20
        $region19: #{mel_spectrogram_extractor.1} parent=11 // pred_region
          _
        $region20: #{mel_spectrogram_extractor.1} parent=11 // pred_fallthru
          _
      $region12: #{mel_spectrogram_extractor.1} parent=5 // pred_fallthru
        _
      %p124 = scmp.lt.s32.totalorder %s9, 2
      // Predicated region
      $region21: #{mel_spectrogram_extractor.1} parent=5 // pred_check
        %p125 = pneg %p124
      $region22: #{mel_spectrogram_extractor.1} parent=5 // pred_check_branch
        %127 = sbr.rel (%p125) target = $region24
      $region23: #{mel_spectrogram_extractor.1} parent=5 // pred_region
        // Predicated region
        $region25: #{mel_spectrogram_extractor.1} parent=23 // pred_check
          %p128 = pneg %p29
        $region26: #{mel_spectrogram_extractor.1} parent=23 // pred_check_branch
          %130 = sbr.rel (%p128) target = $region28
        $region27: #{mel_spectrogram_extractor.1} parent=23 // pred_region
          %s131 = smul.u32 16, %s9
          %s132 = ssub.s32 26, %s131
          %p133 = scmp.lt.s32.totalorder %s132, 16
          %s134 = scalar_select %p133, %s132, 16
          %s135 = smul.u32 4, %s134
          %s136 = smul.u32 %s135, 4
          %p137 = scmp.lt.s32.totalorder %s131, 25
          %s138 = scalar_select %p137, %s131, 25
          %s139 = smul.addr %s138, 4
          %s140 = smul.addr %s139, 4
          %s141 = scalar_lea.vmem %s0, %s140
          %s142 = smul.u32 16, %s9
          %s143 = ssub.s32 26, %s142
          %p144 = scmp.lt.s32.totalorder %s143, 16
          %s145 = scalar_select %p144, %s143, 16
          %s146 = smul.u32 4, %s145
          %s147 = smul.u32 %s146, 4
        $region28: #{mel_spectrogram_extractor.1} parent=23 // pred_fallthru
          _
      $region24: #{mel_spectrogram_extractor.1} parent=5 // pred_fallthru
        _
      %p148 = scmp.le.s32.totalorder 1, %s9
      %p149 = scmp.lt.s32.totalorder %s9, 3
      %p150 = pnand %p148, %p149
      %p151 = pneg %p150
      // Predicated region
      $region29: #{mel_spectrogram_extractor.1} parent=5 // pred_check
        _
      $region30: #{mel_spectrogram_extractor.1} parent=5 // pred_check_branch
        %153 = sbr.rel (%p150) target = $region32
      $region31: #{mel_spectrogram_extractor.1} parent=5 // pred_region
        %s154 = ssub.s32 %s9, 1
        %s155 = smul.u32 16, %s14
        %s156 = ssub.s32 26, %s155
        %p157 = scmp.lt.s32.totalorder %s156, 16
        %s158 = scalar_select %p157, %s156, 16
        %s159 = smul.u32 4, %s158
        %s160 = smul.u32 %s159, 4
        %p161 = scmp.lt.s32.totalorder %s155, 25
        %s162 = scalar_select %p161, %s155, 25
        %s163 = smul.addr %s162, 4
        %s164 = smul.addr %s163, 4
        %s165 = scalar_lea.vmem %s0, %s164
        %p166 = pneg %p35
        %p167 = pneg %p32
        %p168 = pneg %p56
        %p169 = pneg %p53
        %p170 = pneg %p77
        %p171 = pneg %p74
        %p172 = pneg %p103
        %p173 = pneg %p100
        %s174 = sand.u32 %s90, 1
        %s175 = sand.u32 %s90, 1
        %s176 = smul.addr %s175, 128
        %s177 = scalar_lea.vmem [#allocation2], %s176
        %s178 = smul.u32 16, %s14
        %s179 = ssub.s32 26, %s178
        %p180 = scmp.lt.s32.totalorder %s179, 16
        %s181 = scalar_select %p180, %s179, 16
        %s182 = smul.u32 4, %s181
        %s183 = smul.u32 %s182, 4
        %p184 = scmp.lt.s32.totalorder %s178, 25
        %s185 = scalar_select %p184, %s178, 25
        %s186 = smul.addr %s185, 4
        %s187 = smul.addr %s186, 4
        %s188 = scalar_lea.vmem %s0, %s187
        %s189 = smul.u32 16, %s14
        %s190 = ssub.s32 26, %s189
        %p191 = scmp.lt.s32.totalorder %s190, 16
        %s192 = scalar_select %p191, %s190, 16
        %s193 = smul.u32 4, %s192
        %s194 = smul.u32 %s193, 4
        %v196 = vld [vmem:[%s188] sm:$0xff]
        %v197 = vld [vmem:[%s188 + $0x8] sm:$0xff]
        %v198 = vld [vmem:[%s188 + $0x10] sm:$0xff]
        %v199 = vld [vmem:[%s188 + $0x18] sm:$0xff]
        %v200 = vld [vmem:[%s188 + $0x20] sm:$0xff]
        %v201 = vld [vmem:[%s188 + $0x28] sm:$0xff]
        %v202 = vld [vmem:[%s188 + $0x30] sm:$0xff]
        %v203 = vld [vmem:[%s188 + $0x38] sm:$0xff]
        %v204 = vld [vmem:[%s188 + $0x40] sm:$0xff]
        %v205 = vld [vmem:[%s188 + $0x48] sm:$0xff]
        %v206 = vld [vmem:[%s188 + $0x50] sm:$0xff]
        %v207 = vld [vmem:[%s188 + $0x58] sm:$0xff]
        %v208 = vld [vmem:[%s188 + $0x60] sm:$0xff]
        %v209 = vld [vmem:[%s188 + $0x68] sm:$0xff]
        %v210 = vld [vmem:[%s188 + $0x70] sm:$0xff]
        %v211 = vld [vmem:[%s188 + $0x78] sm:$0xff]
        %v212 = vld [vmem:[%s188 + $0x80] sm:$0xff]
        %v213 = vld [vmem:[%s188 + $0x88] sm:$0xff]
        %v214 = vld [vmem:[%s188 + $0x90] sm:$0xff]
        %v215 = vld [vmem:[%s188 + $0x98] sm:$0xff]
        %v216 = vld [vmem:[%s188 + $0xa0] sm:$0xff]
        %v217 = vld [vmem:[%s188 + $0xa8] sm:$0xff]
        %v218 = vld [vmem:[%s188 + $0xb0] sm:$0xff]
        %v219 = vld [vmem:[%s188 + $0xb8] sm:$0xff]
        %v220 = vld [vmem:[%s188 + $0xc0] sm:$0xff]
        %v221 = vld [vmem:[%s188 + $0xc8] sm:$0xff]
        %v222 = vld [vmem:[%s188 + $0xd0] sm:$0xff]
        %v223 = vld [vmem:[%s188 + $0xd8] sm:$0xff]
        %v224 = vld [vmem:[%s188 + $0xe0] sm:$0xff]
        %v225 = vld [vmem:[%s188 + $0xe8] sm:$0xff]
        %v226 = vld [vmem:[%s188 + $0xf0] sm:$0xff]
        %v227 = vld [vmem:[%s188 + $0xf8] sm:$0xff]
        %v228 = vld [vmem:[%s1] sm:$0xff]
        %v229 = vld [vmem:[%s1 + $0x8] sm:$0xff]
        %v230 = vld [vmem:[%s1 + $0x10] sm:$0xff]
        %v231 = vld [vmem:[%s1 + $0x18] sm:$0xff]
        %v232 = vld [vmem:[%s1 + $0x20] sm:$0xff]
        %v233 = vld [vmem:[%s1 + $0x28] sm:$0xff]
        %v234 = vld [vmem:[%s1 + $0x30] sm:$0xff]
        %v235 = vld [vmem:[%s1 + $0x38] sm:$0xff]
        %v236 = vld [vmem:[%s1 + $0x40] sm:$0xff]
        %v237 = vld [vmem:[%s1 + $0x48] sm:$0xff]
        %v238 = vld [vmem:[%s1 + $0x50] sm:$0xff]
        %v239 = vld [vmem:[%s1 + $0x58] sm:$0xff]
        %v240 = vld [vmem:[%s1 + $0x60] sm:$0xff]
        %v241 = vld [vmem:[%s1 + $0x68] sm:$0xff]
        %v242 = vld [vmem:[%s1 + $0x70] sm:$0xff]
        %v243 = vld [vmem:[%s1 + $0x78] sm:$0xff]
        %v244 = vld [vmem:[%s1 + $0x80] sm:$0xff]
        %v245 = vld [vmem:[%s1 + $0x88] sm:$0xff]
        %v246 = vld [vmem:[%s1 + $0x90] sm:$0xff]
        %v247 = vld [vmem:[%s1 + $0x98] sm:$0xff]
        %v248 = vld [vmem:[%s1 + $0xa0] sm:$0xff]
        %v249 = vld [vmem:[%s1 + $0xa8] sm:$0xff]
        %v250 = vld [vmem:[%s1 + $0xb0] sm:$0xff]
        %v251 = vld [vmem:[%s1 + $0xb8] sm:$0xff]
        %v252 = vld [vmem:[%s1 + $0xc0] sm:$0xff]
        %v253 = vld [vmem:[%s1 + $0xc8] sm:$0xff]
        %v254 = vld [vmem:[%s1 + $0xd0] sm:$0xff]
        %v255 = vld [vmem:[%s1 + $0xd8] sm:$0xff]
        %v256 = vld [vmem:[%s1 + $0xe0] sm:$0xff]
        %v257 = vld [vmem:[%s1 + $0xe8] sm:$0xff]
        %v258 = vld [vmem:[%s1 + $0xf0] sm:$0xff]
        %v259 = vld [vmem:[%s1 + $0xf8] sm:$0xff]
        %v260 = vld [vmem:[%s1 + $0x100] sm:$0xff]
        %v261 = vld [vmem:[%s1 + $0x108] sm:$0xff]
        %v262 = vld [vmem:[%s1 + $0x110] sm:$0xff]
        %v263 = vld [vmem:[%s1 + $0x118] sm:$0xff]
        %v264 = vld [vmem:[%s1 + $0x120] sm:$0xff]
        %v265 = vld [vmem:[%s1 + $0x128] sm:$0xff]
        %v266 = vld [vmem:[%s1 + $0x130] sm:$0xff]
        %v267 = vld [vmem:[%s1 + $0x138] sm:$0xff]
        %v268 = vld [vmem:[%s1 + $0x140] sm:$0xff]
        %v269 = vld [vmem:[%s1 + $0x148] sm:$0xff]
        %v270 = vld [vmem:[%s1 + $0x150] sm:$0xff]
        %v271 = vld [vmem:[%s1 + $0x158] sm:$0xff]
        %v272 = vld [vmem:[%s1 + $0x160] sm:$0xff]
        %v273 = vld [vmem:[%s1 + $0x168] sm:$0xff]
        %v274 = vld [vmem:[%s1 + $0x170] sm:$0xff]
        %v275 = vld [vmem:[%s1 + $0x178] sm:$0xff]
        %v276 = vld [vmem:[%s1 + $0x180] sm:$0xff]
        %v277 = vld [vmem:[%s1 + $0x188] sm:$0xff]
        %v278 = vld [vmem:[%s1 + $0x190] sm:$0xff]
        %v279 = vld [vmem:[%s1 + $0x198] sm:$0xff]
        %v280 = vld [vmem:[%s1 + $0x1a0] sm:$0xff]
        %v281 = vld [vmem:[%s1 + $0x1a8] sm:$0xff]
        %v282 = vld [vmem:[%s1 + $0x1b0] sm:$0xff]
        %v283 = vld [vmem:[%s1 + $0x1b8] sm:$0xff]
        %v284 = vld [vmem:[%s1 + $0x1c0] sm:$0xff]
        %v285 = vld [vmem:[%s1 + $0x1c8] sm:$0xff]
        %v286 = vld [vmem:[%s1 + $0x1d0] sm:$0xff]
        %v287 = vld [vmem:[%s1 + $0x1d8] sm:$0xff]
        %v288 = vld [vmem:[%s1 + $0x1e0] sm:$0xff]
        %v289 = vld [vmem:[%s1 + $0x1e8] sm:$0xff]
        %v290 = vld [vmem:[%s1 + $0x1f0] sm:$0xff]
        %v291 = vld [vmem:[%s1 + $0x1f8] sm:$0xff]
        %v292 = vld [vmem:[%s1 + $0x200] sm:$0xff]
        %v293 = vld [vmem:[%s1 + $0x208] sm:$0xff]
        %v294 = vld [vmem:[%s1 + $0x210] sm:$0xff]
        %v295 = vld [vmem:[%s1 + $0x218] sm:$0xff]
        %v296 = vld [vmem:[%s1 + $0x220] sm:$0xff]
        %v297 = vld [vmem:[%s1 + $0x228] sm:$0xff]
        %v298 = vld [vmem:[%s1 + $0x230] sm:$0xff]
        %v299 = vld [vmem:[%s1 + $0x238] sm:$0xff]
        %v300 = vld [vmem:[%s1 + $0x240] sm:$0xff]
        %v301 = vld [vmem:[%s1 + $0x248] sm:$0xff]
        %v302 = vld [vmem:[%s1 + $0x250] sm:$0xff]
        %v303 = vld [vmem:[%s1 + $0x258] sm:$0xff]
        %v304 = vld [vmem:[%s1 + $0x260] sm:$0xff]
        %v305 = vld [vmem:[%s1 + $0x268] sm:$0xff]
        %v306 = vld [vmem:[%s1 + $0x270] sm:$0xff]
        %v307 = vld [vmem:[%s1 + $0x278] sm:$0xff]
        %v308 = vld [vmem:[%s1 + $0x280] sm:$0xff]
        %v309 = vld [vmem:[%s1 + $0x288] sm:$0xff]
        %v310 = vld [vmem:[%s1 + $0x290] sm:$0xff]
        %v311 = vld [vmem:[%s1 + $0x298] sm:$0xff]
        %v312 = vld [vmem:[%s1 + $0x2a0] sm:$0xff]
        %v313 = vld [vmem:[%s1 + $0x2a8] sm:$0xff]
        %v314 = vld [vmem:[%s1 + $0x2b0] sm:$0xff]
        %v315 = vld [vmem:[%s1 + $0x2b8] sm:$0xff]
        %v316 = vld [vmem:[%s1 + $0x2c0] sm:$0xff]
        %v317 = vld [vmem:[%s1 + $0x2c8] sm:$0xff]
        %v318 = vld [vmem:[%s1 + $0x2d0] sm:$0xff]
        %v319 = vld [vmem:[%s1 + $0x2d8] sm:$0xff]
        %v320 = vld [vmem:[%s1 + $0x2e0] sm:$0xff]
        %v321 = vld [vmem:[%s1 + $0x2e8] sm:$0xff]
        %v322 = vld [vmem:[%s1 + $0x2f0] sm:$0xff]
        %v323 = vld [vmem:[%s1 + $0x2f8] sm:$0xff]
        %v324 = vld [vmem:[%s1 + $0x300] sm:$0xff]
        %v325 = vld [vmem:[%s1 + $0x308] sm:$0xff]
        %v326 = vld [vmem:[%s1 + $0x310] sm:$0xff]
        %v327 = vld [vmem:[%s1 + $0x318] sm:$0xff]
        %v328 = vld [vmem:[%s1 + $0x320] sm:$0xff]
        %v329 = vld [vmem:[%s1 + $0x328] sm:$0xff]
        %v330 = vld [vmem:[%s1 + $0x330] sm:$0xff]
        %v331 = vld [vmem:[%s1 + $0x338] sm:$0xff]
        %v332 = vld [vmem:[%s1 + $0x340] sm:$0xff]
        %v333 = vld [vmem:[%s1 + $0x348] sm:$0xff]
        %v334 = vld [vmem:[%s1 + $0x350] sm:$0xff]
        %v335 = vld [vmem:[%s1 + $0x358] sm:$0xff]
        %v336 = vld [vmem:[%s1 + $0x360] sm:$0xff]
        %v337 = vld [vmem:[%s1 + $0x368] sm:$0xff]
        %v338 = vld [vmem:[%s1 + $0x370] sm:$0xff]
        %v339 = vld [vmem:[%s1 + $0x378] sm:$0xff]
        %v340 = vld [vmem:[%s1 + $0x380] sm:$0xff]
        %v341 = vld [vmem:[%s1 + $0x388] sm:$0xff]
        %v342 = vld [vmem:[%s1 + $0x390] sm:$0xff]
        %v343 = vld [vmem:[%s1 + $0x398] sm:$0xff]
        %v344 = vld [vmem:[%s1 + $0x3a0] sm:$0xff]
        %v345 = vld [vmem:[%s1 + $0x3a8] sm:$0xff]
        %v346 = vld [vmem:[%s1 + $0x3b0] sm:$0xff]
        %v347 = vld [vmem:[%s1 + $0x3b8] sm:$0xff]
        %v380 = vunpack.c.l.b16 %v196
        %v381 = vunpack.c.h.b16 %v196
        %v382 = vunpack.c.l.b16 %v197
        %v383 = vunpack.c.h.b16 %v197
        %v384 = vunpack.c.l.b16 %v198
        %v385 = vunpack.c.h.b16 %v198
        %v386 = vunpack.c.l.b16 %v199
        %v387 = vunpack.c.h.b16 %v199
        %v388 = vunpack.c.l.b16 %v200
        %v389 = vunpack.c.h.b16 %v200
        %v390 = vunpack.c.l.b16 %v201
        %v391 = vunpack.c.h.b16 %v201
        %v392 = vunpack.c.l.b16 %v202
        %v393 = vunpack.c.h.b16 %v202
        %v394 = vunpack.c.l.b16 %v203
        %v395 = vunpack.c.h.b16 %v203
        %v396 = vunpack.c.l.b16 %v204
        %v397 = vunpack.c.h.b16 %v204
        %v398 = vunpack.c.l.b16 %v205
        %v399 = vunpack.c.h.b16 %v205
        %v400 = vunpack.c.l.b16 %v206
        %v401 = vunpack.c.h.b16 %v206
        %v402 = vunpack.c.l.b16 %v207
        %v403 = vunpack.c.h.b16 %v207
        %v404 = vunpack.c.l.b16 %v208
        %v405 = vunpack.c.h.b16 %v208
        %v406 = vunpack.c.l.b16 %v209
        %v407 = vunpack.c.h.b16 %v209
        %v408 = vunpack.c.l.b16 %v210
        %v409 = vunpack.c.h.b16 %v210
        %v410 = vunpack.c.l.b16 %v211
        %v411 = vunpack.c.h.b16 %v211
        %v412 = vunpack.c.l.b16 %v212
        %v413 = vunpack.c.h.b16 %v212
        %v414 = vunpack.c.l.b16 %v213
        %v415 = vunpack.c.h.b16 %v213
        %v416 = vunpack.c.l.b16 %v214
        %v417 = vunpack.c.h.b16 %v214
        %v418 = vunpack.c.l.b16 %v215
        %v419 = vunpack.c.h.b16 %v215
        %v420 = vunpack.c.l.b16 %v216
        %v421 = vunpack.c.h.b16 %v216
        %v422 = vunpack.c.l.b16 %v217
        %v423 = vunpack.c.h.b16 %v217
        %v424 = vunpack.c.l.b16 %v218
        %v425 = vunpack.c.h.b16 %v218
        %v426 = vunpack.c.l.b16 %v219
        %v427 = vunpack.c.h.b16 %v219
        %v428 = vunpack.c.l.b16 %v220
        %v429 = vunpack.c.h.b16 %v220
        %v430 = vunpack.c.l.b16 %v221
        %v431 = vunpack.c.h.b16 %v221
        %v432 = vunpack.c.l.b16 %v222
        %v433 = vunpack.c.h.b16 %v222
        %v434 = vunpack.c.l.b16 %v223
        %v435 = vunpack.c.h.b16 %v223
        %v436 = vunpack.c.l.b16 %v224
        %v437 = vunpack.c.h.b16 %v224
        %v438 = vunpack.c.l.b16 %v225
        %v439 = vunpack.c.h.b16 %v225
        %v440 = vunpack.c.l.b16 %v226
        %v441 = vunpack.c.h.b16 %v226
        %v442 = vunpack.c.l.b16 %v227
        %v443 = vunpack.c.h.b16 %v227
        %v444 = vpack.c.b16 %v384, %v380
        %v445 = vpack.c.b16 %v385, %v381
        %v446 = vpack.c.b16 %v386, %v382
        %v447 = vpack.c.b16 %v387, %v383
        %v448 = vpack.c.b16 %v392, %v388
        %v449 = vpack.c.b16 %v393, %v389
        %v450 = vpack.c.b16 %v394, %v390
        %v451 = vpack.c.b16 %v395, %v391
        %v452 = vpack.c.b16 %v400, %v396
        %v453 = vpack.c.b16 %v401, %v397
        %v454 = vpack.c.b16 %v402, %v398
        %v455 = vpack.c.b16 %v403, %v399
        %v456 = vpack.c.b16 %v408, %v404
        %v457 = vpack.c.b16 %v409, %v405
        %v458 = vpack.c.b16 %v410, %v406
        %v459 = vpack.c.b16 %v411, %v407
        %v460 = vpack.c.b16 %v416, %v412
        %v461 = vpack.c.b16 %v417, %v413
        %v462 = vpack.c.b16 %v418, %v414
        %v463 = vpack.c.b16 %v419, %v415
        %v464 = vpack.c.b16 %v424, %v420
        %v465 = vpack.c.b16 %v425, %v421
        %v466 = vpack.c.b16 %v426, %v422
        %v467 = vpack.c.b16 %v427, %v423
        %v468 = vpack.c.b16 %v432, %v428
        %v469 = vpack.c.b16 %v433, %v429
        %v470 = vpack.c.b16 %v434, %v430
        %v471 = vpack.c.b16 %v435, %v431
        %v472 = vpack.c.b16 %v440, %v436
        %v473 = vpack.c.b16 %v441, %v437
        %v474 = vpack.c.b16 %v442, %v438
        %v475 = vpack.c.b16 %v443, %v439
        %v620 = vunpack.c.l.b16 %v228
        %v621 = vunpack.c.h.b16 %v228
        %v622 = vunpack.c.l.b16 %v229
        %v623 = vunpack.c.h.b16 %v229
        %v624 = vunpack.c.l.b16 %v230
        %v625 = vunpack.c.h.b16 %v230
        %v626 = vunpack.c.l.b16 %v231
        %v627 = vunpack.c.h.b16 %v231
        %v628 = vunpack.c.l.b16 %v232
        %v629 = vunpack.c.h.b16 %v232
        %v630 = vunpack.c.l.b16 %v233
        %v631 = vunpack.c.h.b16 %v233
        %v632 = vunpack.c.l.b16 %v234
        %v633 = vunpack.c.h.b16 %v234
        %v634 = vunpack.c.l.b16 %v235
        %v635 = vunpack.c.h.b16 %v235
        %v636 = vunpack.c.l.b16 %v236
        %v637 = vunpack.c.h.b16 %v236
        %v638 = vunpack.c.l.b16 %v237
        %v639 = vunpack.c.h.b16 %v237
        %v640 = vunpack.c.l.b16 %v238
        %v641 = vunpack.c.h.b16 %v238
        %v642 = vunpack.c.l.b16 %v239
        %v643 = vunpack.c.h.b16 %v239
        %v644 = vunpack.c.l.b16 %v240
        %v645 = vunpack.c.h.b16 %v240
        %v646 = vunpack.c.l.b16 %v241
        %v647 = vunpack.c.h.b16 %v241
        %v648 = vunpack.c.l.b16 %v242
        %v649 = vunpack.c.h.b16 %v242
        %v650 = vunpack.c.l.b16 %v243
        %v651 = vunpack.c.h.b16 %v243
        %v652 = vunpack.c.l.b16 %v244
        %v653 = vunpack.c.h.b16 %v244
        %v654 = vunpack.c.l.b16 %v245
        %v655 = vunpack.c.h.b16 %v245
        %v656 = vunpack.c.l.b16 %v246
        %v657 = vunpack.c.h.b16 %v246
        %v658 = vunpack.c.l.b16 %v247
        %v659 = vunpack.c.h.b16 %v247
        %v660 = vunpack.c.l.b16 %v248
        %v661 = vunpack.c.h.b16 %v248
        %v662 = vunpack.c.l.b16 %v249
        %v663 = vunpack.c.h.b16 %v249
        %v664 = vunpack.c.l.b16 %v250
        %v665 = vunpack.c.h.b16 %v250
        %v666 = vunpack.c.l.b16 %v251
        %v667 = vunpack.c.h.b16 %v251
        %v668 = vunpack.c.l.b16 %v252
        %v669 = vunpack.c.h.b16 %v252
        %v670 = vunpack.c.l.b16 %v253
        %v671 = vunpack.c.h.b16 %v253
        %v672 = vunpack.c.l.b16 %v254
        %v673 = vunpack.c.h.b16 %v254
        %v674 = vunpack.c.l.b16 %v255
        %v675 = vunpack.c.h.b16 %v255
        %v676 = vunpack.c.l.b16 %v256
        %v677 = vunpack.c.h.b16 %v256
        %v678 = vunpack.c.l.b16 %v257
        %v679 = vunpack.c.h.b16 %v257
        %v680 = vunpack.c.l.b16 %v258
        %v681 = vunpack.c.h.b16 %v258
        %v682 = vunpack.c.l.b16 %v259
        %v683 = vunpack.c.h.b16 %v259
        %v684 = vunpack.c.l.b16 %v260
        %v685 = vunpack.c.h.b16 %v260
        %v686 = vunpack.c.l.b16 %v261
        %v687 = vunpack.c.h.b16 %v261
        %v688 = vunpack.c.l.b16 %v262
        %v689 = vunpack.c.h.b16 %v262
        %v690 = vunpack.c.l.b16 %v263
        %v691 = vunpack.c.h.b16 %v263
        %v692 = vunpack.c.l.b16 %v264
        %v693 = vunpack.c.h.b16 %v264
        %v694 = vunpack.c.l.b16 %v265
        %v695 = vunpack.c.h.b16 %v265
        %v696 = vunpack.c.l.b16 %v266
        %v697 = vunpack.c.h.b16 %v266
        %v698 = vunpack.c.l.b16 %v267
        %v699 = vunpack.c.h.b16 %v267
        %v700 = vunpack.c.l.b16 %v268
        %v701 = vunpack.c.h.b16 %v268
        %v702 = vunpack.c.l.b16 %v269
        %v703 = vunpack.c.h.b16 %v269
        %v704 = vunpack.c.l.b16 %v270
        %v705 = vunpack.c.h.b16 %v270
        %v706 = vunpack.c.l.b16 %v271
        %v707 = vunpack.c.h.b16 %v271
        %v708 = vunpack.c.l.b16 %v272
        %v709 = vunpack.c.h.b16 %v272
        %v710 = vunpack.c.l.b16 %v273
        %v711 = vunpack.c.h.b16 %v273
        %v712 = vunpack.c.l.b16 %v274
        %v713 = vunpack.c.h.b16 %v274
        %v714 = vunpack.c.l.b16 %v275
        %v715 = vunpack.c.h.b16 %v275
        %v716 = vunpack.c.l.b16 %v276
        %v717 = vunpack.c.h.b16 %v276
        %v718 = vunpack.c.l.b16 %v277
        %v719 = vunpack.c.h.b16 %v277
        %v720 = vunpack.c.l.b16 %v278
        %v721 = vunpack.c.h.b16 %v278
        %v722 = vunpack.c.l.b16 %v279
        %v723 = vunpack.c.h.b16 %v279
        %v724 = vunpack.c.l.b16 %v280
        %v725 = vunpack.c.h.b16 %v280
        %v726 = vunpack.c.l.b16 %v281
        %v727 = vunpack.c.h.b16 %v281
        %v728 = vunpack.c.l.b16 %v282
        %v729 = vunpack.c.h.b16 %v282
        %v730 = vunpack.c.l.b16 %v283
        %v731 = vunpack.c.h.b16 %v283
        %v732 = vunpack.c.l.b16 %v284
        %v733 = vunpack.c.h.b16 %v284
        %v734 = vunpack.c.l.b16 %v285
        %v735 = vunpack.c.h.b16 %v285
        %v736 = vunpack.c.l.b16 %v286
        %v737 = vunpack.c.h.b16 %v286
        %v738 = vunpack.c.l.b16 %v287
        %v739 = vunpack.c.h.b16 %v287
        %v740 = vunpack.c.l.b16 %v288
        %v741 = vunpack.c.h.b16 %v288
        %v742 = vunpack.c.l.b16 %v289
        %v743 = vunpack.c.h.b16 %v289
        %v744 = vunpack.c.l.b16 %v290
        %v745 = vunpack.c.h.b16 %v290
        %v746 = vunpack.c.l.b16 %v291
        %v747 = vunpack.c.h.b16 %v291
        %v748 = vunpack.c.l.b16 %v292
        %v749 = vunpack.c.h.b16 %v292
        %v750 = vunpack.c.l.b16 %v293
        %v751 = vunpack.c.h.b16 %v293
        %v752 = vunpack.c.l.b16 %v294
        %v753 = vunpack.c.h.b16 %v294
        %v754 = vunpack.c.l.b16 %v295
        %v755 = vunpack.c.h.b16 %v295
        %v756 = vunpack.c.l.b16 %v296
        %v757 = vunpack.c.h.b16 %v296
        %v758 = vunpack.c.l.b16 %v297
        %v759 = vunpack.c.h.b16 %v297
        %v760 = vunpack.c.l.b16 %v298
        %v761 = vunpack.c.h.b16 %v298
        %v762 = vunpack.c.l.b16 %v299
        %v763 = vunpack.c.h.b16 %v299
        %v764 = vunpack.c.l.b16 %v300
        %v765 = vunpack.c.h.b16 %v300
        %v766 = vunpack.c.l.b16 %v301
        %v767 = vunpack.c.h.b16 %v301
        %v768 = vunpack.c.l.b16 %v302
        %v769 = vunpack.c.h.b16 %v302
        %v770 = vunpack.c.l.b16 %v303
        %v771 = vunpack.c.h.b16 %v303
        %v772 = vunpack.c.l.b16 %v304
        %v773 = vunpack.c.h.b16 %v304
        %v774 = vunpack.c.l.b16 %v305
        %v775 = vunpack.c.h.b16 %v305
        %v776 = vunpack.c.l.b16 %v306
        %v777 = vunpack.c.h.b16 %v306
        %v778 = vunpack.c.l.b16 %v307
        %v779 = vunpack.c.h.b16 %v307
        %v780 = vunpack.c.l.b16 %v308
        %v781 = vunpack.c.h.b16 %v308
        %v782 = vunpack.c.l.b16 %v309
        %v783 = vunpack.c.h.b16 %v309
        %v784 = vunpack.c.l.b16 %v310
        %v785 = vunpack.c.h.b16 %v310
        %v786 = vunpack.c.l.b16 %v311
        %v787 = vunpack.c.h.b16 %v311
        %v788 = vunpack.c.l.b16 %v312
        %v789 = vunpack.c.h.b16 %v312
        %v790 = vunpack.c.l.b16 %v313
        %v791 = vunpack.c.h.b16 %v313
        %v792 = vunpack.c.l.b16 %v314
        %v793 = vunpack.c.h.b16 %v314
        %v794 = vunpack.c.l.b16 %v315
        %v795 = vunpack.c.h.b16 %v315
        %v796 = vunpack.c.l.b16 %v316
        %v797 = vunpack.c.h.b16 %v316
        %v798 = vunpack.c.l.b16 %v317
        %v799 = vunpack.c.h.b16 %v317
        %v800 = vunpack.c.l.b16 %v318
        %v801 = vunpack.c.h.b16 %v318
        %v802 = vunpack.c.l.b16 %v319
        %v803 = vunpack.c.h.b16 %v319
        %v804 = vunpack.c.l.b16 %v320
        %v805 = vunpack.c.h.b16 %v320
        %v806 = vunpack.c.l.b16 %v321
        %v807 = vunpack.c.h.b16 %v321
        %v808 = vunpack.c.l.b16 %v322
        %v809 = vunpack.c.h.b16 %v322
        %v810 = vunpack.c.l.b16 %v323
        %v811 = vunpack.c.h.b16 %v323
        %v812 = vunpack.c.l.b16 %v324
        %v813 = vunpack.c.h.b16 %v324
        %v814 = vunpack.c.l.b16 %v325
        %v815 = vunpack.c.h.b16 %v325
        %v816 = vunpack.c.l.b16 %v326
        %v817 = vunpack.c.h.b16 %v326
        %v818 = vunpack.c.l.b16 %v327
        %v819 = vunpack.c.h.b16 %v327
        %v820 = vunpack.c.l.b16 %v328
        %v821 = vunpack.c.h.b16 %v328
        %v822 = vunpack.c.l.b16 %v329
        %v823 = vunpack.c.h.b16 %v329
        %v824 = vunpack.c.l.b16 %v330
        %v825 = vunpack.c.h.b16 %v330
        %v826 = vunpack.c.l.b16 %v331
        %v827 = vunpack.c.h.b16 %v331
        %v828 = vunpack.c.l.b16 %v332
        %v829 = vunpack.c.h.b16 %v332
        %v830 = vunpack.c.l.b16 %v333
        %v831 = vunpack.c.h.b16 %v333
        %v832 = vunpack.c.l.b16 %v334
        %v833 = vunpack.c.h.b16 %v334
        %v834 = vunpack.c.l.b16 %v335
        %v835 = vunpack.c.h.b16 %v335
        %v836 = vunpack.c.l.b16 %v336
        %v837 = vunpack.c.h.b16 %v336
        %v838 = vunpack.c.l.b16 %v337
        %v839 = vunpack.c.h.b16 %v337
        %v840 = vunpack.c.l.b16 %v338
        %v841 = vunpack.c.h.b16 %v338
        %v842 = vunpack.c.l.b16 %v339
        %v843 = vunpack.c.h.b16 %v339
        %v844 = vunpack.c.l.b16 %v340
        %v845 = vunpack.c.h.b16 %v340
        %v846 = vunpack.c.l.b16 %v341
        %v847 = vunpack.c.h.b16 %v341
        %v848 = vunpack.c.l.b16 %v342
        %v849 = vunpack.c.h.b16 %v342
        %v850 = vunpack.c.l.b16 %v343
        %v851 = vunpack.c.h.b16 %v343
        %v852 = vunpack.c.l.b16 %v344
        %v853 = vunpack.c.h.b16 %v344
        %v854 = vunpack.c.l.b16 %v345
        %v855 = vunpack.c.h.b16 %v345
        %v856 = vunpack.c.l.b16 %v346
        %v857 = vunpack.c.h.b16 %v346
        %v858 = vunpack.c.l.b16 %v347
        %v859 = vunpack.c.h.b16 %v347
        %v860 = vpack.c.b16 %v624, %v620
        %v861 = vpack.c.b16 %v625, %v621
        %v862 = vpack.c.b16 %v626, %v622
        %v863 = vpack.c.b16 %v627, %v623
        %v864 = vpack.c.b16 %v632, %v628
        %v865 = vpack.c.b16 %v633, %v629
        %v866 = vpack.c.b16 %v634, %v630
        %v867 = vpack.c.b16 %v635, %v631
        %v868 = vpack.c.b16 %v640, %v636
        %v869 = vpack.c.b16 %v641, %v637
        %v870 = vpack.c.b16 %v642, %v638
        %v871 = vpack.c.b16 %v643, %v639
        %v872 = vpack.c.b16 %v648, %v644
        %v873 = vpack.c.b16 %v649, %v645
        %v874 = vpack.c.b16 %v650, %v646
        %v875 = vpack.c.b16 %v651, %v647
        %v876 = vpack.c.b16 %v656, %v652
        %v877 = vpack.c.b16 %v657, %v653
        %v878 = vpack.c.b16 %v658, %v654
        %v879 = vpack.c.b16 %v659, %v655
        %v880 = vpack.c.b16 %v664, %v660
        %v881 = vpack.c.b16 %v665, %v661
        %v882 = vpack.c.b16 %v666, %v662
        %v883 = vpack.c.b16 %v667, %v663
        %v884 = vpack.c.b16 %v672, %v668
        %v885 = vpack.c.b16 %v673, %v669
        %v886 = vpack.c.b16 %v674, %v670
        %v887 = vpack.c.b16 %v675, %v671
        %v888 = vpack.c.b16 %v680, %v676
        %v889 = vpack.c.b16 %v681, %v677
        %v890 = vpack.c.b16 %v682, %v678
        %v891 = vpack.c.b16 %v683, %v679
        %v892 = vpack.c.b16 %v688, %v684
        %v893 = vpack.c.b16 %v689, %v685
        %v894 = vpack.c.b16 %v690, %v686
        %v895 = vpack.c.b16 %v691, %v687
        %v896 = vpack.c.b16 %v696, %v692
        %v897 = vpack.c.b16 %v697, %v693
        %v898 = vpack.c.b16 %v698, %v694
        %v899 = vpack.c.b16 %v699, %v695
        %v900 = vpack.c.b16 %v704, %v700
        %v901 = vpack.c.b16 %v705, %v701
        %v902 = vpack.c.b16 %v706, %v702
        %v903 = vpack.c.b16 %v707, %v703
        %v904 = vpack.c.b16 %v712, %v708
        %v905 = vpack.c.b16 %v713, %v709
        %v906 = vpack.c.b16 %v714, %v710
        %v907 = vpack.c.b16 %v715, %v711
        %v908 = vpack.c.b16 %v720, %v716
        %v909 = vpack.c.b16 %v721, %v717
        %v910 = vpack.c.b16 %v722, %v718
        %v911 = vpack.c.b16 %v723, %v719
        %v912 = vpack.c.b16 %v728, %v724
        %v913 = vpack.c.b16 %v729, %v725
        %v914 = vpack.c.b16 %v730, %v726
        %v915 = vpack.c.b16 %v731, %v727
        %v916 = vpack.c.b16 %v736, %v732
        %v917 = vpack.c.b16 %v737, %v733
        %v918 = vpack.c.b16 %v738, %v734
        %v919 = vpack.c.b16 %v739, %v735
        %v920 = vpack.c.b16 %v744, %v740
        %v921 = vpack.c.b16 %v745, %v741
        %v922 = vpack.c.b16 %v746, %v742
        %v923 = vpack.c.b16 %v747, %v743
        %v924 = vpack.c.b16 %v752, %v748
        %v925 = vpack.c.b16 %v753, %v749
        %v926 = vpack.c.b16 %v754, %v750
        %v927 = vpack.c.b16 %v755, %v751
        %v928 = vpack.c.b16 %v760, %v756
        %v929 = vpack.c.b16 %v761, %v757
        %v930 = vpack.c.b16 %v762, %v758
        %v931 = vpack.c.b16 %v763, %v759
        %v932 = vpack.c.b16 %v768, %v764
        %v933 = vpack.c.b16 %v769, %v765
        %v934 = vpack.c.b16 %v770, %v766
        %v935 = vpack.c.b16 %v771, %v767
        %v936 = vpack.c.b16 %v776, %v772
        %v937 = vpack.c.b16 %v777, %v773
        %v938 = vpack.c.b16 %v778, %v774
        %v939 = vpack.c.b16 %v779, %v775
        %v940 = vpack.c.b16 %v784, %v780
        %v941 = vpack.c.b16 %v785, %v781
        %v942 = vpack.c.b16 %v786, %v782
        %v943 = vpack.c.b16 %v787, %v783
        %v944 = vpack.c.b16 %v792, %v788
        %v945 = vpack.c.b16 %v793, %v789
        %v946 = vpack.c.b16 %v794, %v790
        %v947 = vpack.c.b16 %v795, %v791
        %v948 = vpack.c.b16 %v800, %v796
        %v949 = vpack.c.b16 %v801, %v797
        %v950 = vpack.c.b16 %v802, %v798
        %v951 = vpack.c.b16 %v803, %v799
        %v952 = vpack.c.b16 %v808, %v804
        %v953 = vpack.c.b16 %v809, %v805
        %v954 = vpack.c.b16 %v810, %v806
        %v955 = vpack.c.b16 %v811, %v807
        %v956 = vpack.c.b16 %v816, %v812
        %v957 = vpack.c.b16 %v817, %v813
        %v958 = vpack.c.b16 %v818, %v814
        %v959 = vpack.c.b16 %v819, %v815
        %v960 = vpack.c.b16 %v824, %v820
        %v961 = vpack.c.b16 %v825, %v821
        %v962 = vpack.c.b16 %v826, %v822
        %v963 = vpack.c.b16 %v827, %v823
        %v964 = vpack.c.b16 %v832, %v828
        %v965 = vpack.c.b16 %v833, %v829
        %v966 = vpack.c.b16 %v834, %v830
        %v967 = vpack.c.b16 %v835, %v831
        %v968 = vpack.c.b16 %v840, %v836
        %v969 = vpack.c.b16 %v841, %v837
        %v970 = vpack.c.b16 %v842, %v838
        %v971 = vpack.c.b16 %v843, %v839
        %v972 = vpack.c.b16 %v848, %v844
        %v973 = vpack.c.b16 %v849, %v845
        %v974 = vpack.c.b16 %v850, %v846
        %v975 = vpack.c.b16 %v851, %v847
        %v976 = vpack.c.b16 %v856, %v852
        %v977 = vpack.c.b16 %v857, %v853
        %v978 = vpack.c.b16 %v858, %v854
        %v979 = vpack.c.b16 %v859, %v855
        %vm1100 = vcmask 785408
        %v1102 = vsel %vm1100, %v447, 0
        %v1105 = vsel %vm1100, %v451, 0
        %v1108 = vsel %vm1100, %v455, 0
        %v1111 = vsel %vm1100, %v459, 0
        %v1114 = vsel %vm1100, %v463, 0
        %v1117 = vsel %vm1100, %v467, 0
        %v1120 = vsel %vm1100, %v471, 0
        %v1123 = vsel %vm1100, %v475, 0
        %1125 = vmatpush.bf16.msra.mxu0 %v888
        %1126 = vmatpush.bf16.msra.mxu0 %v884
        %1127 = vmatpush.bf16.msra.mxu0 %v880
        %1128 = vmatpush.bf16.msra.mxu0 %v876
        %1129 = vmatpush.bf16.msra.mxu0 %v872
        %1130 = vmatpush.bf16.msra.mxu0 %v868
        %1131 = vmatpush.bf16.msra.mxu0 %v864
        %1132 = vmatpush.bf16.msra.mxu0 %v860
        %1133 = vmatmul.bf16.gmra.mxu0 %v444
        %v1134 = vpop.f32.mrf.mxu0
        %v1135 = vadd.f32 0.0, %v1134
        %v1136 = vpop.f32.mrf.mxu0
        %v1137 = vadd.f32 0.0, %v1136
        %1138 = vmatmul.bf16.gmra.mxu0 %v448
        %v1139 = vpop.f32.mrf.mxu0
        %v1140 = vadd.f32 0.0, %v1139
        %v1141 = vpop.f32.mrf.mxu0
        %v1142 = vadd.f32 0.0, %v1141
        %1143 = vmatmul.bf16.gmra.mxu0 %v452
        %v1144 = vpop.f32.mrf.mxu0
        %v1145 = vadd.f32 0.0, %v1144
        %v1146 = vpop.f32.mrf.mxu0
        %v1147 = vadd.f32 0.0, %v1146
        %1148 = vmatmul.bf16.gmra.mxu0 %v456
        %v1149 = vpop.f32.mrf.mxu0
        %v1150 = vadd.f32 0.0, %v1149
        %v1151 = vpop.f32.mrf.mxu0
        %v1152 = vadd.f32 0.0, %v1151
        %1153 = vmatmul.bf16.gmra.mxu0 %v460
        %v1154 = vpop.f32.mrf.mxu0
        %v1155 = vadd.f32 0.0, %v1154
        %v1156 = vpop.f32.mrf.mxu0
        %v1157 = vadd.f32 0.0, %v1156
        %1158 = vmatmul.bf16.gmra.mxu0 %v464
        %v1159 = vpop.f32.mrf.mxu0
        %v1160 = vadd.f32 0.0, %v1159
        %v1161 = vpop.f32.mrf.mxu0
        %v1162 = vadd.f32 0.0, %v1161
        %1163 = vmatmul.bf16.gmra.mxu0 %v468
        %v1164 = vpop.f32.mrf.mxu0
        %v1165 = vadd.f32 0.0, %v1164
        %v1166 = vpop.f32.mrf.mxu0
        %v1167 = vadd.f32 0.0, %v1166
        %1168 = vmatmul.bf16.gmra.mxu0 %v472
        %v1169 = vpop.f32.mrf.mxu0
        %v1170 = vadd.f32 0.0, %v1169
        %v1171 = vpop.f32.mrf.mxu0
        %v1172 = vadd.f32 0.0, %v1171
        %1173 = vdwg.mxu0
        %1174 = vmatpush.bf16.msra.mxu0 %v920
        %1175 = vmatpush.bf16.msra.mxu0 %v916
        %1176 = vmatpush.bf16.msra.mxu0 %v912
        %1177 = vmatpush.bf16.msra.mxu0 %v908
        %1178 = vmatpush.bf16.msra.mxu0 %v904
        %1179 = vmatpush.bf16.msra.mxu0 %v900
        %1180 = vmatpush.bf16.msra.mxu0 %v896
        %1181 = vmatpush.bf16.msra.mxu0 %v892
        %1182 = vmatmul.bf16.gmra.mxu0 %v445
        %v1183 = vpop.f32.mrf.mxu0
        %v1184 = vadd.f32 %v1135, %v1183
        %v1185 = vpop.f32.mrf.mxu0
        %v1186 = vadd.f32 %v1137, %v1185
        %1187 = vmatmul.bf16.gmra.mxu0 %v449
        %v1188 = vpop.f32.mrf.mxu0
        %v1189 = vadd.f32 %v1140, %v1188
        %v1190 = vpop.f32.mrf.mxu0
        %v1191 = vadd.f32 %v1142, %v1190
        %1192 = vmatmul.bf16.gmra.mxu0 %v453
        %v1193 = vpop.f32.mrf.mxu0
        %v1194 = vadd.f32 %v1145, %v1193
        %v1195 = vpop.f32.mrf.mxu0
        %v1196 = vadd.f32 %v1147, %v1195
        %1197 = vmatmul.bf16.gmra.mxu0 %v457
        %v1198 = vpop.f32.mrf.mxu0
        %v1199 = vadd.f32 %v1150, %v1198
        %v1200 = vpop.f32.mrf.mxu0
        %v1201 = vadd.f32 %v1152, %v1200
        %1202 = vmatmul.bf16.gmra.mxu0 %v461
        %v1203 = vpop.f32.mrf.mxu0
        %v1204 = vadd.f32 %v1155, %v1203
        %v1205 = vpop.f32.mrf.mxu0
        %v1206 = vadd.f32 %v1157, %v1205
        %1207 = vmatmul.bf16.gmra.mxu0 %v465
        %v1208 = vpop.f32.mrf.mxu0
        %v1209 = vadd.f32 %v1160, %v1208
        %v1210 = vpop.f32.mrf.mxu0
        %v1211 = vadd.f32 %v1162, %v1210
        %1212 = vmatmul.bf16.gmra.mxu0 %v469
        %v1213 = vpop.f32.mrf.mxu0
        %v1214 = vadd.f32 %v1165, %v1213
        %v1215 = vpop.f32.mrf.mxu0
        %v1216 = vadd.f32 %v1167, %v1215
        %1217 = vmatmul.bf16.gmra.mxu0 %v473
        %v1218 = vpop.f32.mrf.mxu0
        %v1219 = vadd.f32 %v1170, %v1218
        %v1220 = vpop.f32.mrf.mxu0
        %v1221 = vadd.f32 %v1172, %v1220
        %1222 = vdwg.mxu0
        %1223 = vmatpush.bf16.msra.mxu0 %v952
        %1224 = vmatpush.bf16.msra.mxu0 %v948
        %1225 = vmatpush.bf16.msra.mxu0 %v944
        %1226 = vmatpush.bf16.msra.mxu0 %v940
        %1227 = vmatpush.bf16.msra.mxu0 %v936
        %1228 = vmatpush.bf16.msra.mxu0 %v932
        %1229 = vmatpush.bf16.msra.mxu0 %v928
        %1230 = vmatpush.bf16.msra.mxu0 %v924
        %1231 = vmatmul.bf16.gmra.mxu0 %v446
        %v1232 = vpop.f32.mrf.mxu0
        %v1233 = vadd.f32 %v1184, %v1232
        %v1234 = vpop.f32.mrf.mxu0
        %v1235 = vadd.f32 %v1186, %v1234
        %1236 = vmatmul.bf16.gmra.mxu0 %v450
        %v1237 = vpop.f32.mrf.mxu0
        %v1238 = vadd.f32 %v1189, %v1237
        %v1239 = vpop.f32.mrf.mxu0
        %v1240 = vadd.f32 %v1191, %v1239
        %1241 = vmatmul.bf16.gmra.mxu0 %v454
        %v1242 = vpop.f32.mrf.mxu0
        %v1243 = vadd.f32 %v1194, %v1242
        %v1244 = vpop.f32.mrf.mxu0
        %v1245 = vadd.f32 %v1196, %v1244
        %1246 = vmatmul.bf16.gmra.mxu0 %v458
        %v1247 = vpop.f32.mrf.mxu0
        %v1248 = vadd.f32 %v1199, %v1247
        %v1249 = vpop.f32.mrf.mxu0
        %v1250 = vadd.f32 %v1201, %v1249
        %1251 = vmatmul.bf16.gmra.mxu0 %v462
        %v1252 = vpop.f32.mrf.mxu0
        %v1253 = vadd.f32 %v1204, %v1252
        %v1254 = vpop.f32.mrf.mxu0
        %v1255 = vadd.f32 %v1206, %v1254
        %1256 = vmatmul.bf16.gmra.mxu0 %v466
        %v1257 = vpop.f32.mrf.mxu0
        %v1258 = vadd.f32 %v1209, %v1257
        %v1259 = vpop.f32.mrf.mxu0
        %v1260 = vadd.f32 %v1211, %v1259
        %1261 = vmatmul.bf16.gmra.mxu0 %v470
        %v1262 = vpop.f32.mrf.mxu0
        %v1263 = vadd.f32 %v1214, %v1262
        %v1264 = vpop.f32.mrf.mxu0
        %v1265 = vadd.f32 %v1216, %v1264
        %1266 = vmatmul.bf16.gmra.mxu0 %v474
        %v1267 = vpop.f32.mrf.mxu0
        %v1268 = vadd.f32 %v1219, %v1267
        %v1269 = vpop.f32.mrf.mxu0
        %v1270 = vadd.f32 %v1221, %v1269
        %1271 = vdwg.mxu0
        %1272 = vmatpush.bf16.msra.mxu0 0
        %1273 = vmatpush.bf16.msra.mxu0 0
        %1274 = vmatpush.bf16.msra.mxu0 %v976
        %1275 = vmatpush.bf16.msra.mxu0 %v972
        %1276 = vmatpush.bf16.msra.mxu0 %v968
        %1277 = vmatpush.bf16.msra.mxu0 %v964
        %1278 = vmatpush.bf16.msra.mxu0 %v960
        %1279 = vmatpush.bf16.msra.mxu0 %v956
        %1280 = vmatmul.bf16.gmra.mxu0 %v1102
        %v1281 = vpop.f32.mrf.mxu0
        %v1282 = vadd.f32 %v1233, %v1281
        %v1283 = vpop.f32.mrf.mxu0
        %v1284 = vadd.f32 %v1235, %v1283
        %1285 = vmatmul.bf16.gmra.mxu0 %v1105
        %v1286 = vpop.f32.mrf.mxu0
        %v1287 = vadd.f32 %v1238, %v1286
        %v1288 = vpop.f32.mrf.mxu0
        %v1289 = vadd.f32 %v1240, %v1288
        %1290 = vmatmul.bf16.gmra.mxu0 %v1108
        %v1291 = vpop.f32.mrf.mxu0
        %v1292 = vadd.f32 %v1243, %v1291
        %v1293 = vpop.f32.mrf.mxu0
        %v1294 = vadd.f32 %v1245, %v1293
        %1295 = vmatmul.bf16.gmra.mxu0 %v1111
        %v1296 = vpop.f32.mrf.mxu0
        %v1297 = vadd.f32 %v1248, %v1296
        %v1298 = vpop.f32.mrf.mxu0
        %v1299 = vadd.f32 %v1250, %v1298
        %1300 = vmatmul.bf16.gmra.mxu0 %v1114
        %v1301 = vpop.f32.mrf.mxu0
        %v1302 = vadd.f32 %v1253, %v1301
        %v1303 = vpop.f32.mrf.mxu0
        %v1304 = vadd.f32 %v1255, %v1303
        %1305 = vmatmul.bf16.gmra.mxu0 %v1117
        %v1306 = vpop.f32.mrf.mxu0
        %v1307 = vadd.f32 %v1258, %v1306
        %v1308 = vpop.f32.mrf.mxu0
        %v1309 = vadd.f32 %v1260, %v1308
        %1310 = vmatmul.bf16.gmra.mxu0 %v1120
        %v1311 = vpop.f32.mrf.mxu0
        %v1312 = vadd.f32 %v1263, %v1311
        %v1313 = vpop.f32.mrf.mxu0
        %v1314 = vadd.f32 %v1265, %v1313
        %1315 = vmatmul.bf16.gmra.mxu0 %v1123
        %v1316 = vpop.f32.mrf.mxu0
        %v1317 = vadd.f32 %v1268, %v1316
        %v1318 = vpop.f32.mrf.mxu0
        %v1319 = vadd.f32 %v1270, %v1318
        %1320 = vdwg.mxu0
        %1321 = vmatpush.bf16.msra.mxu0 %v889
        %1322 = vmatpush.bf16.msra.mxu0 %v885
        %1323 = vmatpush.bf16.msra.mxu0 %v881
        %1324 = vmatpush.bf16.msra.mxu0 %v877
        %1325 = vmatpush.bf16.msra.mxu0 %v873
        %1326 = vmatpush.bf16.msra.mxu0 %v869
        %1327 = vmatpush.bf16.msra.mxu0 %v865
        %1328 = vmatpush.bf16.msra.mxu0 %v861
        %1329 = vmatmul.bf16.gmra.mxu0 %v444
        %v1330 = vpop.f32.mrf.mxu0
        %v1331 = vadd.f32 0.0, %v1330
        %v1332 = vpop.f32.mrf.mxu0
        %v1333 = vadd.f32 0.0, %v1332
        %1334 = vmatmul.bf16.gmra.mxu0 %v448
        %v1335 = vpop.f32.mrf.mxu0
        %v1336 = vadd.f32 0.0, %v1335
        %v1337 = vpop.f32.mrf.mxu0
        %v1338 = vadd.f32 0.0, %v1337
        %1339 = vmatmul.bf16.gmra.mxu0 %v452
        %v1340 = vpop.f32.mrf.mxu0
        %v1341 = vadd.f32 0.0, %v1340
        %v1342 = vpop.f32.mrf.mxu0
        %v1343 = vadd.f32 0.0, %v1342
        %1344 = vmatmul.bf16.gmra.mxu0 %v456
        %v1345 = vpop.f32.mrf.mxu0
        %v1346 = vadd.f32 0.0, %v1345
        %v1347 = vpop.f32.mrf.mxu0
        %v1348 = vadd.f32 0.0, %v1347
        %1349 = vmatmul.bf16.gmra.mxu0 %v460
        %v1350 = vpop.f32.mrf.mxu0
        %v1351 = vadd.f32 0.0, %v1350
        %v1352 = vpop.f32.mrf.mxu0
        %v1353 = vadd.f32 0.0, %v1352
        %1354 = vmatmul.bf16.gmra.mxu0 %v464
        %v1355 = vpop.f32.mrf.mxu0
        %v1356 = vadd.f32 0.0, %v1355
        %v1357 = vpop.f32.mrf.mxu0
        %v1358 = vadd.f32 0.0, %v1357
        %1359 = vmatmul.bf16.gmra.mxu0 %v468
        %v1360 = vpop.f32.mrf.mxu0
        %v1361 = vadd.f32 0.0, %v1360
        %v1362 = vpop.f32.mrf.mxu0
        %v1363 = vadd.f32 0.0, %v1362
        %1364 = vmatmul.bf16.gmra.mxu0 %v472
        %v1365 = vpop.f32.mrf.mxu0
        %v1366 = vadd.f32 0.0, %v1365
        %v1367 = vpop.f32.mrf.mxu0
        %v1368 = vadd.f32 0.0, %v1367
        %1369 = vdwg.mxu0
        %1370 = vmatpush.bf16.msra.mxu0 %v921
        %1371 = vmatpush.bf16.msra.mxu0 %v917
        %1372 = vmatpush.bf16.msra.mxu0 %v913
        %1373 = vmatpush.bf16.msra.mxu0 %v909
        %1374 = vmatpush.bf16.msra.mxu0 %v905
        %1375 = vmatpush.bf16.msra.mxu0 %v901
        %1376 = vmatpush.bf16.msra.mxu0 %v897
        %1377 = vmatpush.bf16.msra.mxu0 %v893
        %1378 = vmatmul.bf16.gmra.mxu0 %v445
        %v1379 = vpop.f32.mrf.mxu0
        %v1380 = vadd.f32 %v1331, %v1379
        %v1381 = vpop.f32.mrf.mxu0
        %v1382 = vadd.f32 %v1333, %v1381
        %1383 = vmatmul.bf16.gmra.mxu0 %v449
        %v1384 = vpop.f32.mrf.mxu0
        %v1385 = vadd.f32 %v1336, %v1384
        %v1386 = vpop.f32.mrf.mxu0
        %v1387 = vadd.f32 %v1338, %v1386
        %1388 = vmatmul.bf16.gmra.mxu0 %v453
        %v1389 = vpop.f32.mrf.mxu0
        %v1390 = vadd.f32 %v1341, %v1389
        %v1391 = vpop.f32.mrf.mxu0
        %v1392 = vadd.f32 %v1343, %v1391
        %1393 = vmatmul.bf16.gmra.mxu0 %v457
        %v1394 = vpop.f32.mrf.mxu0
        %v1395 = vadd.f32 %v1346, %v1394
        %v1396 = vpop.f32.mrf.mxu0
        %v1397 = vadd.f32 %v1348, %v1396
        %1398 = vmatmul.bf16.gmra.mxu0 %v461
        %v1399 = vpop.f32.mrf.mxu0
        %v1400 = vadd.f32 %v1351, %v1399
        %v1401 = vpop.f32.mrf.mxu0
        %v1402 = vadd.f32 %v1353, %v1401
        %1403 = vmatmul.bf16.gmra.mxu0 %v465
        %v1404 = vpop.f32.mrf.mxu0
        %v1405 = vadd.f32 %v1356, %v1404
        %v1406 = vpop.f32.mrf.mxu0
        %v1407 = vadd.f32 %v1358, %v1406
        %1408 = vmatmul.bf16.gmra.mxu0 %v469
        %v1409 = vpop.f32.mrf.mxu0
        %v1410 = vadd.f32 %v1361, %v1409
        %v1411 = vpop.f32.mrf.mxu0
        %v1412 = vadd.f32 %v1363, %v1411
        %1413 = vmatmul.bf16.gmra.mxu0 %v473
        %v1414 = vpop.f32.mrf.mxu0
        %v1415 = vadd.f32 %v1366, %v1414
        %v1416 = vpop.f32.mrf.mxu0
        %v1417 = vadd.f32 %v1368, %v1416
        %1418 = vdwg.mxu0
        %1419 = vmatpush.bf16.msra.mxu0 %v953
        %1420 = vmatpush.bf16.msra.mxu0 %v949
        %1421 = vmatpush.bf16.msra.mxu0 %v945
        %1422 = vmatpush.bf16.msra.mxu0 %v941
        %1423 = vmatpush.bf16.msra.mxu0 %v937
        %1424 = vmatpush.bf16.msra.mxu0 %v933
        %1425 = vmatpush.bf16.msra.mxu0 %v929
        %1426 = vmatpush.bf16.msra.mxu0 %v925
        %1427 = vmatmul.bf16.gmra.mxu0 %v446
        %v1428 = vpop.f32.mrf.mxu0
        %v1429 = vadd.f32 %v1380, %v1428
        %v1430 = vpop.f32.mrf.mxu0
        %v1431 = vadd.f32 %v1382, %v1430
        %1432 = vmatmul.bf16.gmra.mxu0 %v450
        %v1433 = vpop.f32.mrf.mxu0
        %v1434 = vadd.f32 %v1385, %v1433
        %v1435 = vpop.f32.mrf.mxu0
        %v1436 = vadd.f32 %v1387, %v1435
        %1437 = vmatmul.bf16.gmra.mxu0 %v454
        %v1438 = vpop.f32.mrf.mxu0
        %v1439 = vadd.f32 %v1390, %v1438
        %v1440 = vpop.f32.mrf.mxu0
        %v1441 = vadd.f32 %v1392, %v1440
        %1442 = vmatmul.bf16.gmra.mxu0 %v458
        %v1443 = vpop.f32.mrf.mxu0
        %v1444 = vadd.f32 %v1395, %v1443
        %v1445 = vpop.f32.mrf.mxu0
        %v1446 = vadd.f32 %v1397, %v1445
        %1447 = vmatmul.bf16.gmra.mxu0 %v462
        %v1448 = vpop.f32.mrf.mxu0
        %v1449 = vadd.f32 %v1400, %v1448
        %v1450 = vpop.f32.mrf.mxu0
        %v1451 = vadd.f32 %v1402, %v1450
        %1452 = vmatmul.bf16.gmra.mxu0 %v466
        %v1453 = vpop.f32.mrf.mxu0
        %v1454 = vadd.f32 %v1405, %v1453
        %v1455 = vpop.f32.mrf.mxu0
        %v1456 = vadd.f32 %v1407, %v1455
        %1457 = vmatmul.bf16.gmra.mxu0 %v470
        %v1458 = vpop.f32.mrf.mxu0
        %v1459 = vadd.f32 %v1410, %v1458
        %v1460 = vpop.f32.mrf.mxu0
        %v1461 = vadd.f32 %v1412, %v1460
        %1462 = vmatmul.bf16.gmra.mxu0 %v474
        %v1463 = vpop.f32.mrf.mxu0
        %v1464 = vadd.f32 %v1415, %v1463
        %v1465 = vpop.f32.mrf.mxu0
        %v1466 = vadd.f32 %v1417, %v1465
        %1467 = vdwg.mxu0
        %1468 = vmatpush.bf16.msra.mxu0 0
        %1469 = vmatpush.bf16.msra.mxu0 0
        %1470 = vmatpush.bf16.msra.mxu0 %v977
        %1471 = vmatpush.bf16.msra.mxu0 %v973
        %1472 = vmatpush.bf16.msra.mxu0 %v969
        %1473 = vmatpush.bf16.msra.mxu0 %v965
        %1474 = vmatpush.bf16.msra.mxu0 %v961
        %1475 = vmatpush.bf16.msra.mxu0 %v957
        %1476 = vmatmul.bf16.gmra.mxu0 %v1102
        %v1477 = vpop.f32.mrf.mxu0
        %v1478 = vadd.f32 %v1429, %v1477
        %v1479 = vpop.f32.mrf.mxu0
        %v1480 = vadd.f32 %v1431, %v1479
        %1481 = vmatmul.bf16.gmra.mxu0 %v1105
        %v1482 = vpop.f32.mrf.mxu0
        %v1483 = vadd.f32 %v1434, %v1482
        %v1484 = vpop.f32.mrf.mxu0
        %v1485 = vadd.f32 %v1436, %v1484
        %1486 = vmatmul.bf16.gmra.mxu0 %v1108
        %v1487 = vpop.f32.mrf.mxu0
        %v1488 = vadd.f32 %v1439, %v1487
        %v1489 = vpop.f32.mrf.mxu0
        %v1490 = vadd.f32 %v1441, %v1489
        %1491 = vmatmul.bf16.gmra.mxu0 %v1111
        %v1492 = vpop.f32.mrf.mxu0
        %v1493 = vadd.f32 %v1444, %v1492
        %v1494 = vpop.f32.mrf.mxu0
        %v1495 = vadd.f32 %v1446, %v1494
        %1496 = vmatmul.bf16.gmra.mxu0 %v1114
        %v1497 = vpop.f32.mrf.mxu0
        %v1498 = vadd.f32 %v1449, %v1497
        %v1499 = vpop.f32.mrf.mxu0
        %v1500 = vadd.f32 %v1451, %v1499
        %1501 = vmatmul.bf16.gmra.mxu0 %v1117
        %v1502 = vpop.f32.mrf.mxu0
        %v1503 = vadd.f32 %v1454, %v1502
        %v1504 = vpop.f32.mrf.mxu0
        %v1505 = vadd.f32 %v1456, %v1504
        %1506 = vmatmul.bf16.gmra.mxu0 %v1120
        %v1507 = vpop.f32.mrf.mxu0
        %v1508 = vadd.f32 %v1459, %v1507
        %v1509 = vpop.f32.mrf.mxu0
        %v1510 = vadd.f32 %v1461, %v1509
        %1511 = vmatmul.bf16.gmra.mxu0 %v1123
        %v1512 = vpop.f32.mrf.mxu0
        %v1513 = vadd.f32 %v1464, %v1512
        %v1514 = vpop.f32.mrf.mxu0
        %v1515 = vadd.f32 %v1466, %v1514
        %1516 = vdwg.mxu0
        %1517 = vmatpush.bf16.msra.mxu0 %v890
        %1518 = vmatpush.bf16.msra.mxu0 %v886
        %1519 = vmatpush.bf16.msra.mxu0 %v882
        %1520 = vmatpush.bf16.msra.mxu0 %v878
        %1521 = vmatpush.bf16.msra.mxu0 %v874
        %1522 = vmatpush.bf16.msra.mxu0 %v870
        %1523 = vmatpush.bf16.msra.mxu0 %v866
        %1524 = vmatpush.bf16.msra.mxu0 %v862
        %1525 = vmatmul.bf16.gmra.mxu0 %v444
        %v1526 = vpop.f32.mrf.mxu0
        %v1527 = vadd.f32 0.0, %v1526
        %v1528 = vpop.f32.mrf.mxu0
        %v1529 = vadd.f32 0.0, %v1528
        %1530 = vmatmul.bf16.gmra.mxu0 %v448
        %v1531 = vpop.f32.mrf.mxu0
        %v1532 = vadd.f32 0.0, %v1531
        %v1533 = vpop.f32.mrf.mxu0
        %v1534 = vadd.f32 0.0, %v1533
        %1535 = vmatmul.bf16.gmra.mxu0 %v452
        %v1536 = vpop.f32.mrf.mxu0
        %v1537 = vadd.f32 0.0, %v1536
        %v1538 = vpop.f32.mrf.mxu0
        %v1539 = vadd.f32 0.0, %v1538
        %1540 = vmatmul.bf16.gmra.mxu0 %v456
        %v1541 = vpop.f32.mrf.mxu0
        %v1542 = vadd.f32 0.0, %v1541
        %v1543 = vpop.f32.mrf.mxu0
        %v1544 = vadd.f32 0.0, %v1543
        %1545 = vmatmul.bf16.gmra.mxu0 %v460
        %v1546 = vpop.f32.mrf.mxu0
        %v1547 = vadd.f32 0.0, %v1546
        %v1548 = vpop.f32.mrf.mxu0
        %v1549 = vadd.f32 0.0, %v1548
        %1550 = vmatmul.bf16.gmra.mxu0 %v464
        %v1551 = vpop.f32.mrf.mxu0
        %v1552 = vadd.f32 0.0, %v1551
        %v1553 = vpop.f32.mrf.mxu0
        %v1554 = vadd.f32 0.0, %v1553
        %1555 = vmatmul.bf16.gmra.mxu0 %v468
        %v1556 = vpop.f32.mrf.mxu0
        %v1557 = vadd.f32 0.0, %v1556
        %v1558 = vpop.f32.mrf.mxu0
        %v1559 = vadd.f32 0.0, %v1558
        %1560 = vmatmul.bf16.gmra.mxu0 %v472
        %v1561 = vpop.f32.mrf.mxu0
        %v1562 = vadd.f32 0.0, %v1561
        %v1563 = vpop.f32.mrf.mxu0
        %v1564 = vadd.f32 0.0, %v1563
        %1565 = vdwg.mxu0
        %1566 = vmatpush.bf16.msra.mxu0 %v922
        %1567 = vmatpush.bf16.msra.mxu0 %v918
        %1568 = vmatpush.bf16.msra.mxu0 %v914
        %1569 = vmatpush.bf16.msra.mxu0 %v910
        %1570 = vmatpush.bf16.msra.mxu0 %v906
        %1571 = vmatpush.bf16.msra.mxu0 %v902
        %1572 = vmatpush.bf16.msra.mxu0 %v898
        %1573 = vmatpush.bf16.msra.mxu0 %v894
        %1574 = vmatmul.bf16.gmra.mxu0 %v445
        %v1575 = vpop.f32.mrf.mxu0
        %v1576 = vadd.f32 %v1527, %v1575
        %v1577 = vpop.f32.mrf.mxu0
        %v1578 = vadd.f32 %v1529, %v1577
        %1579 = vmatmul.bf16.gmra.mxu0 %v449
        %v1580 = vpop.f32.mrf.mxu0
        %v1581 = vadd.f32 %v1532, %v1580
        %v1582 = vpop.f32.mrf.mxu0
        %v1583 = vadd.f32 %v1534, %v1582
        %1584 = vmatmul.bf16.gmra.mxu0 %v453
        %v1585 = vpop.f32.mrf.mxu0
        %v1586 = vadd.f32 %v1537, %v1585
        %v1587 = vpop.f32.mrf.mxu0
        %v1588 = vadd.f32 %v1539, %v1587
        %1589 = vmatmul.bf16.gmra.mxu0 %v457
        %v1590 = vpop.f32.mrf.mxu0
        %v1591 = vadd.f32 %v1542, %v1590
        %v1592 = vpop.f32.mrf.mxu0
        %v1593 = vadd.f32 %v1544, %v1592
        %1594 = vmatmul.bf16.gmra.mxu0 %v461
        %v1595 = vpop.f32.mrf.mxu0
        %v1596 = vadd.f32 %v1547, %v1595
        %v1597 = vpop.f32.mrf.mxu0
        %v1598 = vadd.f32 %v1549, %v1597
        %1599 = vmatmul.bf16.gmra.mxu0 %v465
        %v1600 = vpop.f32.mrf.mxu0
        %v1601 = vadd.f32 %v1552, %v1600
        %v1602 = vpop.f32.mrf.mxu0
        %v1603 = vadd.f32 %v1554, %v1602
        %1604 = vmatmul.bf16.gmra.mxu0 %v469
        %v1605 = vpop.f32.mrf.mxu0
        %v1606 = vadd.f32 %v1557, %v1605
        %v1607 = vpop.f32.mrf.mxu0
        %v1608 = vadd.f32 %v1559, %v1607
        %1609 = vmatmul.bf16.gmra.mxu0 %v473
        %v1610 = vpop.f32.mrf.mxu0
        %v1611 = vadd.f32 %v1562, %v1610
        %v1612 = vpop.f32.mrf.mxu0
        %v1613 = vadd.f32 %v1564, %v1612
        %1614 = vdwg.mxu0
        %1615 = vmatpush.bf16.msra.mxu0 %v954
        %1616 = vmatpush.bf16.msra.mxu0 %v950
        %1617 = vmatpush.bf16.msra.mxu0 %v946
        %1618 = vmatpush.bf16.msra.mxu0 %v942
        %1619 = vmatpush.bf16.msra.mxu0 %v938
        %1620 = vmatpush.bf16.msra.mxu0 %v934
        %1621 = vmatpush.bf16.msra.mxu0 %v930
        %1622 = vmatpush.bf16.msra.mxu0 %v926
        %1623 = vmatmul.bf16.gmra.mxu0 %v446
        %v1624 = vpop.f32.mrf.mxu0
        %v1625 = vadd.f32 %v1576, %v1624
        %v1626 = vpop.f32.mrf.mxu0
        %v1627 = vadd.f32 %v1578, %v1626
        %1628 = vmatmul.bf16.gmra.mxu0 %v450
        %v1629 = vpop.f32.mrf.mxu0
        %v1630 = vadd.f32 %v1581, %v1629
        %v1631 = vpop.f32.mrf.mxu0
        %v1632 = vadd.f32 %v1583, %v1631
        %1633 = vmatmul.bf16.gmra.mxu0 %v454
        %v1634 = vpop.f32.mrf.mxu0
        %v1635 = vadd.f32 %v1586, %v1634
        %v1636 = vpop.f32.mrf.mxu0
        %v1637 = vadd.f32 %v1588, %v1636
        %1638 = vmatmul.bf16.gmra.mxu0 %v458
        %v1639 = vpop.f32.mrf.mxu0
        %v1640 = vadd.f32 %v1591, %v1639
        %v1641 = vpop.f32.mrf.mxu0
        %v1642 = vadd.f32 %v1593, %v1641
        %1643 = vmatmul.bf16.gmra.mxu0 %v462
        %v1644 = vpop.f32.mrf.mxu0
        %v1645 = vadd.f32 %v1596, %v1644
        %v1646 = vpop.f32.mrf.mxu0
        %v1647 = vadd.f32 %v1598, %v1646
        %1648 = vmatmul.bf16.gmra.mxu0 %v466
        %v1649 = vpop.f32.mrf.mxu0
        %v1650 = vadd.f32 %v1601, %v1649
        %v1651 = vpop.f32.mrf.mxu0
        %v1652 = vadd.f32 %v1603, %v1651
        %1653 = vmatmul.bf16.gmra.mxu0 %v470
        %v1654 = vpop.f32.mrf.mxu0
        %v1655 = vadd.f32 %v1606, %v1654
        %v1656 = vpop.f32.mrf.mxu0
        %v1657 = vadd.f32 %v1608, %v1656
        %1658 = vmatmul.bf16.gmra.mxu0 %v474
        %v1659 = vpop.f32.mrf.mxu0
        %v1660 = vadd.f32 %v1611, %v1659
        %v1661 = vpop.f32.mrf.mxu0
        %v1662 = vadd.f32 %v1613, %v1661
        %1663 = vdwg.mxu0
        %1664 = vmatpush.bf16.msra.mxu0 0
        %1665 = vmatpush.bf16.msra.mxu0 0
        %1666 = vmatpush.bf16.msra.mxu0 %v978
        %1667 = vmatpush.bf16.msra.mxu0 %v974
        %1668 = vmatpush.bf16.msra.mxu0 %v970
        %1669 = vmatpush.bf16.msra.mxu0 %v966
        %1670 = vmatpush.bf16.msra.mxu0 %v962
        %1671 = vmatpush.bf16.msra.mxu0 %v958
        %1672 = vmatmul.bf16.gmra.mxu0 %v1102
        %v1673 = vpop.f32.mrf.mxu0
        %v1674 = vadd.f32 %v1625, %v1673
        %v1675 = vpop.f32.mrf.mxu0
        %v1676 = vadd.f32 %v1627, %v1675
        %1677 = vmatmul.bf16.gmra.mxu0 %v1105
        %v1678 = vpop.f32.mrf.mxu0
        %v1679 = vadd.f32 %v1630, %v1678
        %v1680 = vpop.f32.mrf.mxu0
        %v1681 = vadd.f32 %v1632, %v1680
        %1682 = vmatmul.bf16.gmra.mxu0 %v1108
        %v1683 = vpop.f32.mrf.mxu0
        %v1684 = vadd.f32 %v1635, %v1683
        %v1685 = vpop.f32.mrf.mxu0
        %v1686 = vadd.f32 %v1637, %v1685
        %1687 = vmatmul.bf16.gmra.mxu0 %v1111
        %v1688 = vpop.f32.mrf.mxu0
        %v1689 = vadd.f32 %v1640, %v1688
        %v1690 = vpop.f32.mrf.mxu0
        %v1691 = vadd.f32 %v1642, %v1690
        %1692 = vmatmul.bf16.gmra.mxu0 %v1114
        %v1693 = vpop.f32.mrf.mxu0
        %v1694 = vadd.f32 %v1645, %v1693
        %v1695 = vpop.f32.mrf.mxu0
        %v1696 = vadd.f32 %v1647, %v1695
        %1697 = vmatmul.bf16.gmra.mxu0 %v1117
        %v1698 = vpop.f32.mrf.mxu0
        %v1699 = vadd.f32 %v1650, %v1698
        %v1700 = vpop.f32.mrf.mxu0
        %v1701 = vadd.f32 %v1652, %v1700
        %1702 = vmatmul.bf16.gmra.mxu0 %v1120
        %v1703 = vpop.f32.mrf.mxu0
        %v1704 = vadd.f32 %v1655, %v1703
        %v1705 = vpop.f32.mrf.mxu0
        %v1706 = vadd.f32 %v1657, %v1705
        %1707 = vmatmul.bf16.gmra.mxu0 %v1123
        %v1708 = vpop.f32.mrf.mxu0
        %v1709 = vadd.f32 %v1660, %v1708
        %v1710 = vpop.f32.mrf.mxu0
        %v1711 = vadd.f32 %v1662, %v1710
        %1712 = vdwg.mxu0
        %1713 = vmatpush.bf16.msra.mxu0 %v891
        %1714 = vmatpush.bf16.msra.mxu0 %v887
        %1715 = vmatpush.bf16.msra.mxu0 %v883
        %1716 = vmatpush.bf16.msra.mxu0 %v879
        %1717 = vmatpush.bf16.msra.mxu0 %v875
        %1718 = vmatpush.bf16.msra.mxu0 %v871
        %1719 = vmatpush.bf16.msra.mxu0 %v867
        %1720 = vmatpush.bf16.msra.mxu0 %v863
        %1721 = vmatmul.bf16.gmra.mxu0 %v444
        %v1722 = vpop.f32.mrf.mxu0
        %v1723 = vadd.f32 0.0, %v1722
        %v1724 = vpop.f32.mrf.mxu0
        %v1725 = vadd.f32 0.0, %v1724
        %1726 = vmatmul.bf16.gmra.mxu0 %v448
        %v1727 = vpop.f32.mrf.mxu0
        %v1728 = vadd.f32 0.0, %v1727
        %v1729 = vpop.f32.mrf.mxu0
        %v1730 = vadd.f32 0.0, %v1729
        %1731 = vmatmul.bf16.gmra.mxu0 %v452
        %v1732 = vpop.f32.mrf.mxu0
        %v1733 = vadd.f32 0.0, %v1732
        %v1734 = vpop.f32.mrf.mxu0
        %v1735 = vadd.f32 0.0, %v1734
        %1736 = vmatmul.bf16.gmra.mxu0 %v456
        %v1737 = vpop.f32.mrf.mxu0
        %v1738 = vadd.f32 0.0, %v1737
        %v1739 = vpop.f32.mrf.mxu0
        %v1740 = vadd.f32 0.0, %v1739
        %1741 = vmatmul.bf16.gmra.mxu0 %v460
        %v1742 = vpop.f32.mrf.mxu0
        %v1743 = vadd.f32 0.0, %v1742
        %v1744 = vpop.f32.mrf.mxu0
        %v1745 = vadd.f32 0.0, %v1744
        %1746 = vmatmul.bf16.gmra.mxu0 %v464
        %v1747 = vpop.f32.mrf.mxu0
        %v1748 = vadd.f32 0.0, %v1747
        %v1749 = vpop.f32.mrf.mxu0
        %v1750 = vadd.f32 0.0, %v1749
        %1751 = vmatmul.bf16.gmra.mxu0 %v468
        %v1752 = vpop.f32.mrf.mxu0
        %v1753 = vadd.f32 0.0, %v1752
        %v1754 = vpop.f32.mrf.mxu0
        %v1755 = vadd.f32 0.0, %v1754
        %1756 = vmatmul.bf16.gmra.mxu0 %v472
        %v1757 = vpop.f32.mrf.mxu0
        %v1758 = vadd.f32 0.0, %v1757
        %v1759 = vpop.f32.mrf.mxu0
        %v1760 = vadd.f32 0.0, %v1759
        %1761 = vdwg.mxu0
        %1762 = vmatpush.bf16.msra.mxu0 %v923
        %1763 = vmatpush.bf16.msra.mxu0 %v919
        %1764 = vmatpush.bf16.msra.mxu0 %v915
        %1765 = vmatpush.bf16.msra.mxu0 %v911
        %1766 = vmatpush.bf16.msra.mxu0 %v907
        %1767 = vmatpush.bf16.msra.mxu0 %v903
        %1768 = vmatpush.bf16.msra.mxu0 %v899
        %1769 = vmatpush.bf16.msra.mxu0 %v895
        %1770 = vmatmul.bf16.gmra.mxu0 %v445
        %v1771 = vpop.f32.mrf.mxu0
        %v1772 = vadd.f32 %v1723, %v1771
        %v1773 = vpop.f32.mrf.mxu0
        %v1774 = vadd.f32 %v1725, %v1773
        %1775 = vmatmul.bf16.gmra.mxu0 %v449
        %v1776 = vpop.f32.mrf.mxu0
        %v1777 = vadd.f32 %v1728, %v1776
        %v1778 = vpop.f32.mrf.mxu0
        %v1779 = vadd.f32 %v1730, %v1778
        %1780 = vmatmul.bf16.gmra.mxu0 %v453
        %v1781 = vpop.f32.mrf.mxu0
        %v1782 = vadd.f32 %v1733, %v1781
        %v1783 = vpop.f32.mrf.mxu0
        %v1784 = vadd.f32 %v1735, %v1783
        %1785 = vmatmul.bf16.gmra.mxu0 %v457
        %v1786 = vpop.f32.mrf.mxu0
        %v1787 = vadd.f32 %v1738, %v1786
        %v1788 = vpop.f32.mrf.mxu0
        %v1789 = vadd.f32 %v1740, %v1788
        %1790 = vmatmul.bf16.gmra.mxu0 %v461
        %v1791 = vpop.f32.mrf.mxu0
        %v1792 = vadd.f32 %v1743, %v1791
        %v1793 = vpop.f32.mrf.mxu0
        %v1794 = vadd.f32 %v1745, %v1793
        %1795 = vmatmul.bf16.gmra.mxu0 %v465
        %v1796 = vpop.f32.mrf.mxu0
        %v1797 = vadd.f32 %v1748, %v1796
        %v1798 = vpop.f32.mrf.mxu0
        %v1799 = vadd.f32 %v1750, %v1798
        %1800 = vmatmul.bf16.gmra.mxu0 %v469
        %v1801 = vpop.f32.mrf.mxu0
        %v1802 = vadd.f32 %v1753, %v1801
        %v1803 = vpop.f32.mrf.mxu0
        %v1804 = vadd.f32 %v1755, %v1803
        %1805 = vmatmul.bf16.gmra.mxu0 %v473
        %v1806 = vpop.f32.mrf.mxu0
        %v1807 = vadd.f32 %v1758, %v1806
        %v1808 = vpop.f32.mrf.mxu0
        %v1809 = vadd.f32 %v1760, %v1808
        %1810 = vdwg.mxu0
        %1811 = vmatpush.bf16.msra.mxu0 %v955
        %1812 = vmatpush.bf16.msra.mxu0 %v951
        %1813 = vmatpush.bf16.msra.mxu0 %v947
        %1814 = vmatpush.bf16.msra.mxu0 %v943
        %1815 = vmatpush.bf16.msra.mxu0 %v939
        %1816 = vmatpush.bf16.msra.mxu0 %v935
        %1817 = vmatpush.bf16.msra.mxu0 %v931
        %1818 = vmatpush.bf16.msra.mxu0 %v927
        %1819 = vmatmul.bf16.gmra.mxu0 %v446
        %v1820 = vpop.f32.mrf.mxu0
        %v1821 = vadd.f32 %v1772, %v1820
        %v1822 = vpop.f32.mrf.mxu0
        %v1823 = vadd.f32 %v1774, %v1822
        %1824 = vmatmul.bf16.gmra.mxu0 %v450
        %v1825 = vpop.f32.mrf.mxu0
        %v1826 = vadd.f32 %v1777, %v1825
        %v1827 = vpop.f32.mrf.mxu0
        %v1828 = vadd.f32 %v1779, %v1827
        %1829 = vmatmul.bf16.gmra.mxu0 %v454
        %v1830 = vpop.f32.mrf.mxu0
        %v1831 = vadd.f32 %v1782, %v1830
        %v1832 = vpop.f32.mrf.mxu0
        %v1833 = vadd.f32 %v1784, %v1832
        %1834 = vmatmul.bf16.gmra.mxu0 %v458
        %v1835 = vpop.f32.mrf.mxu0
        %v1836 = vadd.f32 %v1787, %v1835
        %v1837 = vpop.f32.mrf.mxu0
        %v1838 = vadd.f32 %v1789, %v1837
        %1839 = vmatmul.bf16.gmra.mxu0 %v462
        %v1840 = vpop.f32.mrf.mxu0
        %v1841 = vadd.f32 %v1792, %v1840
        %v1842 = vpop.f32.mrf.mxu0
        %v1843 = vadd.f32 %v1794, %v1842
        %1844 = vmatmul.bf16.gmra.mxu0 %v466
        %v1845 = vpop.f32.mrf.mxu0
        %v1846 = vadd.f32 %v1797, %v1845
        %v1847 = vpop.f32.mrf.mxu0
        %v1848 = vadd.f32 %v1799, %v1847
        %1849 = vmatmul.bf16.gmra.mxu0 %v470
        %v1850 = vpop.f32.mrf.mxu0
        %v1851 = vadd.f32 %v1802, %v1850
        %v1852 = vpop.f32.mrf.mxu0
        %v1853 = vadd.f32 %v1804, %v1852
        %1854 = vmatmul.bf16.gmra.mxu0 %v474
        %v1855 = vpop.f32.mrf.mxu0
        %v1856 = vadd.f32 %v1807, %v1855
        %v1857 = vpop.f32.mrf.mxu0
        %v1858 = vadd.f32 %v1809, %v1857
        %1859 = vdwg.mxu0
        %1860 = vmatpush.bf16.msra.mxu0 0
        %1861 = vmatpush.bf16.msra.mxu0 0
        %1862 = vmatpush.bf16.msra.mxu0 %v979
        %1863 = vmatpush.bf16.msra.mxu0 %v975
        %1864 = vmatpush.bf16.msra.mxu0 %v971
        %1865 = vmatpush.bf16.msra.mxu0 %v967
        %1866 = vmatpush.bf16.msra.mxu0 %v963
        %1867 = vmatpush.bf16.msra.mxu0 %v959
        %1868 = vmatmul.bf16.gmra.mxu0 %v1102
        %v1869 = vpop.f32.mrf.mxu0
        %v1870 = vadd.f32 %v1821, %v1869
        %v1871 = vpop.f32.mrf.mxu0
        %v1872 = vadd.f32 %v1823, %v1871
        %1873 = vmatmul.bf16.gmra.mxu0 %v1105
        %v1874 = vpop.f32.mrf.mxu0
        %v1875 = vadd.f32 %v1826, %v1874
        %v1876 = vpop.f32.mrf.mxu0
        %v1877 = vadd.f32 %v1828, %v1876
        %1878 = vmatmul.bf16.gmra.mxu0 %v1108
        %v1879 = vpop.f32.mrf.mxu0
        %v1880 = vadd.f32 %v1831, %v1879
        %v1881 = vpop.f32.mrf.mxu0
        %v1882 = vadd.f32 %v1833, %v1881
        %1883 = vmatmul.bf16.gmra.mxu0 %v1111
        %v1884 = vpop.f32.mrf.mxu0
        %v1885 = vadd.f32 %v1836, %v1884
        %v1886 = vpop.f32.mrf.mxu0
        %v1887 = vadd.f32 %v1838, %v1886
        %1888 = vmatmul.bf16.gmra.mxu0 %v1114
        %v1889 = vpop.f32.mrf.mxu0
        %v1890 = vadd.f32 %v1841, %v1889
        %v1891 = vpop.f32.mrf.mxu0
        %v1892 = vadd.f32 %v1843, %v1891
        %1893 = vmatmul.bf16.gmra.mxu0 %v1117
        %v1894 = vpop.f32.mrf.mxu0
        %v1895 = vadd.f32 %v1846, %v1894
        %v1896 = vpop.f32.mrf.mxu0
        %v1897 = vadd.f32 %v1848, %v1896
        %1898 = vmatmul.bf16.gmra.mxu0 %v1120
        %v1899 = vpop.f32.mrf.mxu0
        %v1900 = vadd.f32 %v1851, %v1899
        %v1901 = vpop.f32.mrf.mxu0
        %v1902 = vadd.f32 %v1853, %v1901
        %1903 = vmatmul.bf16.gmra.mxu0 %v1123
        %v1904 = vpop.f32.mrf.mxu0
        %v1905 = vadd.f32 %v1856, %v1904
        %v1906 = vpop.f32.mrf.mxu0
        %v1907 = vadd.f32 %v1858, %v1906
        %1908 = vdwg.mxu0
        %v1909 = vmul.f32 %v1282, %v1282
        %v1910 = vmul.f32 %v1478, %v1478
        %v1911 = vmul.f32 %v1674, %v1674
        %v1912 = vmul.f32 %v1870, %v1870
        %v1913 = vmul.f32 %v1284, %v1284
        %v1914 = vmul.f32 %v1480, %v1480
        %v1915 = vmul.f32 %v1676, %v1676
        %v1916 = vmul.f32 %v1872, %v1872
        %v1917 = vmul.f32 %v1287, %v1287
        %v1918 = vmul.f32 %v1483, %v1483
        %v1919 = vmul.f32 %v1679, %v1679
        %v1920 = vmul.f32 %v1875, %v1875
        %v1921 = vmul.f32 %v1289, %v1289
        %v1922 = vmul.f32 %v1485, %v1485
        %v1923 = vmul.f32 %v1681, %v1681
        %v1924 = vmul.f32 %v1877, %v1877
        %v1925 = vmul.f32 %v1292, %v1292
        %v1926 = vmul.f32 %v1488, %v1488
        %v1927 = vmul.f32 %v1684, %v1684
        %v1928 = vmul.f32 %v1880, %v1880
        %v1929 = vmul.f32 %v1294, %v1294
        %v1930 = vmul.f32 %v1490, %v1490
        %v1931 = vmul.f32 %v1686, %v1686
        %v1932 = vmul.f32 %v1882, %v1882
        %v1933 = vmul.f32 %v1297, %v1297
        %v1934 = vmul.f32 %v1493, %v1493
        %v1935 = vmul.f32 %v1689, %v1689
        %v1936 = vmul.f32 %v1885, %v1885
        %v1937 = vmul.f32 %v1299, %v1299
        %v1938 = vmul.f32 %v1495, %v1495
        %v1939 = vmul.f32 %v1691, %v1691
        %v1940 = vmul.f32 %v1887, %v1887
        %v1941 = vmul.f32 %v1302, %v1302
        %v1942 = vmul.f32 %v1498, %v1498
        %v1943 = vmul.f32 %v1694, %v1694
        %v1944 = vmul.f32 %v1890, %v1890
        %v1945 = vmul.f32 %v1304, %v1304
        %v1946 = vmul.f32 %v1500, %v1500
        %v1947 = vmul.f32 %v1696, %v1696
        %v1948 = vmul.f32 %v1892, %v1892
        %v1949 = vmul.f32 %v1307, %v1307
        %v1950 = vmul.f32 %v1503, %v1503
        %v1951 = vmul.f32 %v1699, %v1699
        %v1952 = vmul.f32 %v1895, %v1895
        %v1953 = vmul.f32 %v1309, %v1309
        %v1954 = vmul.f32 %v1505, %v1505
        %v1955 = vmul.f32 %v1701, %v1701
        %v1956 = vmul.f32 %v1897, %v1897
        %v1957 = vmul.f32 %v1312, %v1312
        %v1958 = vmul.f32 %v1508, %v1508
        %v1959 = vmul.f32 %v1704, %v1704
        %v1960 = vmul.f32 %v1900, %v1900
        %v1961 = vmul.f32 %v1314, %v1314
        %v1962 = vmul.f32 %v1510, %v1510
        %v1963 = vmul.f32 %v1706, %v1706
        %v1964 = vmul.f32 %v1902, %v1902
        %v1965 = vmul.f32 %v1317, %v1317
        %v1966 = vmul.f32 %v1513, %v1513
        %v1967 = vmul.f32 %v1709, %v1709
        %v1968 = vmul.f32 %v1905, %v1905
        %v1969 = vmul.f32 %v1319, %v1319
        %v1970 = vmul.f32 %v1515, %v1515
        %v1971 = vmul.f32 %v1711, %v1711
        %v1972 = vmul.f32 %v1907, %v1907
        %v1973 = vld [vmem:[%s2] sm:$0xff]
        %v1974 = vld [vmem:[%s2 + $0x8] sm:$0xff]
        %v1975 = vld [vmem:[%s2 + $0x10] sm:$0xff]
        %v1976 = vld [vmem:[%s2 + $0x18] sm:$0xff]
        %v1977 = vld [vmem:[%s2 + $0x20] sm:$0xff]
        %v1978 = vld [vmem:[%s2 + $0x28] sm:$0xff]
        %v1979 = vld [vmem:[%s2 + $0x30] sm:$0xff]
        %v1980 = vld [vmem:[%s2 + $0x38] sm:$0xff]
        %v1981 = vld [vmem:[%s2 + $0x40] sm:$0xff]
        %v1982 = vld [vmem:[%s2 + $0x48] sm:$0xff]
        %v1983 = vld [vmem:[%s2 + $0x50] sm:$0xff]
        %v1984 = vld [vmem:[%s2 + $0x58] sm:$0xff]
        %v1985 = vld [vmem:[%s2 + $0x60] sm:$0xff]
        %v1986 = vld [vmem:[%s2 + $0x68] sm:$0xff]
        %v1987 = vld [vmem:[%s2 + $0x70] sm:$0xff]
        %v1988 = vld [vmem:[%s2 + $0x78] sm:$0xff]
        %v1989 = vld [vmem:[%s2 + $0x80] sm:$0xff]
        %v1990 = vld [vmem:[%s2 + $0x88] sm:$0xff]
        %v1991 = vld [vmem:[%s2 + $0x90] sm:$0xff]
        %v1992 = vld [vmem:[%s2 + $0x98] sm:$0xff]
        %v1993 = vld [vmem:[%s2 + $0xa0] sm:$0xff]
        %v1994 = vld [vmem:[%s2 + $0xa8] sm:$0xff]
        %v1995 = vld [vmem:[%s2 + $0xb0] sm:$0xff]
        %v1996 = vld [vmem:[%s2 + $0xb8] sm:$0xff]
        %v1997 = vld [vmem:[%s2 + $0xc0] sm:$0xff]
        %v1998 = vld [vmem:[%s2 + $0xc8] sm:$0xff]
        %v1999 = vld [vmem:[%s2 + $0xd0] sm:$0xff]
        %v2000 = vld [vmem:[%s2 + $0xd8] sm:$0xff]
        %v2001 = vld [vmem:[%s2 + $0xe0] sm:$0xff]
        %v2002 = vld [vmem:[%s2 + $0xe8] sm:$0xff]
        %v2003 = vld [vmem:[%s2 + $0xf0] sm:$0xff]
        %v2004 = vld [vmem:[%s2 + $0xf8] sm:$0xff]
        %v2005 = vld [vmem:[%s2 + $0x100] sm:$0xff]
        %v2006 = vld [vmem:[%s2 + $0x108] sm:$0xff]
        %v2007 = vld [vmem:[%s2 + $0x110] sm:$0xff]
        %v2008 = vld [vmem:[%s2 + $0x118] sm:$0xff]
        %v2009 = vld [vmem:[%s2 + $0x120] sm:$0xff]
        %v2010 = vld [vmem:[%s2 + $0x128] sm:$0xff]
        %v2011 = vld [vmem:[%s2 + $0x130] sm:$0xff]
        %v2012 = vld [vmem:[%s2 + $0x138] sm:$0xff]
        %v2013 = vld [vmem:[%s2 + $0x140] sm:$0xff]
        %v2014 = vld [vmem:[%s2 + $0x148] sm:$0xff]
        %v2015 = vld [vmem:[%s2 + $0x150] sm:$0xff]
        %v2016 = vld [vmem:[%s2 + $0x158] sm:$0xff]
        %v2017 = vld [vmem:[%s2 + $0x160] sm:$0xff]
        %v2018 = vld [vmem:[%s2 + $0x168] sm:$0xff]
        %v2019 = vld [vmem:[%s2 + $0x170] sm:$0xff]
        %v2020 = vld [vmem:[%s2 + $0x178] sm:$0xff]
        %v2021 = vld [vmem:[%s2 + $0x180] sm:$0xff]
        %v2022 = vld [vmem:[%s2 + $0x188] sm:$0xff]
        %v2023 = vld [vmem:[%s2 + $0x190] sm:$0xff]
        %v2024 = vld [vmem:[%s2 + $0x198] sm:$0xff]
        %v2025 = vld [vmem:[%s2 + $0x1a0] sm:$0xff]
        %v2026 = vld [vmem:[%s2 + $0x1a8] sm:$0xff]
        %v2027 = vld [vmem:[%s2 + $0x1b0] sm:$0xff]
        %v2028 = vld [vmem:[%s2 + $0x1b8] sm:$0xff]
        %v2029 = vld [vmem:[%s2 + $0x1c0] sm:$0xff]
        %v2030 = vld [vmem:[%s2 + $0x1c8] sm:$0xff]
        %v2031 = vld [vmem:[%s2 + $0x1d0] sm:$0xff]
        %v2032 = vld [vmem:[%s2 + $0x1d8] sm:$0xff]
        %v2033 = vld [vmem:[%s2 + $0x1e0] sm:$0xff]
        %v2034 = vld [vmem:[%s2 + $0x1e8] sm:$0xff]
        %v2035 = vld [vmem:[%s2 + $0x1f0] sm:$0xff]
        %v2036 = vld [vmem:[%s2 + $0x1f8] sm:$0xff]
        %2037 = vmatpush.msra.mxu0 %v1988
        %2038 = vmatpush.msra.mxu0 %v1987
        %2039 = vmatpush.msra.mxu0 %v1986
        %2040 = vmatpush.msra.mxu0 %v1985
        %2041 = vmatpush.msra.mxu0 %v1984
        %2042 = vmatpush.msra.mxu0 %v1983
        %2043 = vmatpush.msra.mxu0 %v1982
        %2044 = vmatpush.msra.mxu0 %v1981
        %2045 = vmatpush.msra.mxu0 %v1980
        %2046 = vmatpush.msra.mxu0 %v1979
        %2047 = vmatpush.msra.mxu0 %v1978
        %2048 = vmatpush.msra.mxu0 %v1977
        %2049 = vmatpush.msra.mxu0 %v1976
        %2050 = vmatpush.msra.mxu0 %v1975
        %2051 = vmatpush.msra.mxu0 %v1974
        %2052 = vmatpush.msra.mxu0 %v1973
        %2053 = vmatmul.f32.gmra.mxu0 %v1909
        %v2054 = vpop.f32.mrf.mxu0
        %v2055 = vadd.f32 0.0, %v2054
        %2056 = vmatmul.f32.gmra.mxu0 %v1913
        %v2057 = vpop.f32.mrf.mxu0
        %v2058 = vadd.f32 0.0, %v2057
        %2059 = vmatmul.f32.gmra.mxu0 %v1917
        %v2060 = vpop.f32.mrf.mxu0
        %v2061 = vadd.f32 0.0, %v2060
        %2062 = vmatmul.f32.gmra.mxu0 %v1921
        %v2063 = vpop.f32.mrf.mxu0
        %v2064 = vadd.f32 0.0, %v2063
        %2065 = vmatmul.f32.gmra.mxu0 %v1925
        %v2066 = vpop.f32.mrf.mxu0
        %v2067 = vadd.f32 0.0, %v2066
        %2068 = vmatmul.f32.gmra.mxu0 %v1929
        %v2069 = vpop.f32.mrf.mxu0
        %v2070 = vadd.f32 0.0, %v2069
        %2071 = vmatmul.f32.gmra.mxu0 %v1933
        %v2072 = vpop.f32.mrf.mxu0
        %v2073 = vadd.f32 0.0, %v2072
        %2074 = vmatmul.f32.gmra.mxu0 %v1937
        %v2075 = vpop.f32.mrf.mxu0
        %v2076 = vadd.f32 0.0, %v2075
        %2077 = vmatmul.f32.gmra.mxu0 %v1941
        %v2078 = vpop.f32.mrf.mxu0
        %v2079 = vadd.f32 0.0, %v2078
        %2080 = vmatmul.f32.gmra.mxu0 %v1945
        %v2081 = vpop.f32.mrf.mxu0
        %v2082 = vadd.f32 0.0, %v2081
        %2083 = vmatmul.f32.gmra.mxu0 %v1949
        %v2084 = vpop.f32.mrf.mxu0
        %v2085 = vadd.f32 0.0, %v2084
        %2086 = vmatmul.f32.gmra.mxu0 %v1953
        %v2087 = vpop.f32.mrf.mxu0
        %v2088 = vadd.f32 0.0, %v2087
        %2089 = vmatmul.f32.gmra.mxu0 %v1957
        %v2090 = vpop.f32.mrf.mxu0
        %v2091 = vadd.f32 0.0, %v2090
        %2092 = vmatmul.f32.gmra.mxu0 %v1961
        %v2093 = vpop.f32.mrf.mxu0
        %v2094 = vadd.f32 0.0, %v2093
        %2095 = vmatmul.f32.gmra.mxu0 %v1965
        %v2096 = vpop.f32.mrf.mxu0
        %v2097 = vadd.f32 0.0, %v2096
        %2098 = vmatmul.f32.gmra.mxu0 %v1969
        %v2099 = vpop.f32.mrf.mxu0
        %v2100 = vadd.f32 0.0, %v2099
        %2101 = vdwg.mxu0
        %2102 = vmatpush.msra.mxu0 %v2004
        %2103 = vmatpush.msra.mxu0 %v2003
        %2104 = vmatpush.msra.mxu0 %v2002
        %2105 = vmatpush.msra.mxu0 %v2001
        %2106 = vmatpush.msra.mxu0 %v2000
        %2107 = vmatpush.msra.mxu0 %v1999
        %2108 = vmatpush.msra.mxu0 %v1998
        %2109 = vmatpush.msra.mxu0 %v1997
        %2110 = vmatpush.msra.mxu0 %v1996
        %2111 = vmatpush.msra.mxu0 %v1995
        %2112 = vmatpush.msra.mxu0 %v1994
        %2113 = vmatpush.msra.mxu0 %v1993
        %2114 = vmatpush.msra.mxu0 %v1992
        %2115 = vmatpush.msra.mxu0 %v1991
        %2116 = vmatpush.msra.mxu0 %v1990
        %2117 = vmatpush.msra.mxu0 %v1989
        %2118 = vmatmul.f32.gmra.mxu0 %v1910
        %v2119 = vpop.f32.mrf.mxu0
        %v2120 = vadd.f32 %v2055, %v2119
        %2121 = vmatmul.f32.gmra.mxu0 %v1914
        %v2122 = vpop.f32.mrf.mxu0
        %v2123 = vadd.f32 %v2058, %v2122
        %2124 = vmatmul.f32.gmra.mxu0 %v1918
        %v2125 = vpop.f32.mrf.mxu0
        %v2126 = vadd.f32 %v2061, %v2125
        %2127 = vmatmul.f32.gmra.mxu0 %v1922
        %v2128 = vpop.f32.mrf.mxu0
        %v2129 = vadd.f32 %v2064, %v2128
        %2130 = vmatmul.f32.gmra.mxu0 %v1926
        %v2131 = vpop.f32.mrf.mxu0
        %v2132 = vadd.f32 %v2067, %v2131
        %2133 = vmatmul.f32.gmra.mxu0 %v1930
        %v2134 = vpop.f32.mrf.mxu0
        %v2135 = vadd.f32 %v2070, %v2134
        %2136 = vmatmul.f32.gmra.mxu0 %v1934
        %v2137 = vpop.f32.mrf.mxu0
        %v2138 = vadd.f32 %v2073, %v2137
        %2139 = vmatmul.f32.gmra.mxu0 %v1938
        %v2140 = vpop.f32.mrf.mxu0
        %v2141 = vadd.f32 %v2076, %v2140
        %2142 = vmatmul.f32.gmra.mxu0 %v1942
        %v2143 = vpop.f32.mrf.mxu0
        %v2144 = vadd.f32 %v2079, %v2143
        %2145 = vmatmul.f32.gmra.mxu0 %v1946
        %v2146 = vpop.f32.mrf.mxu0
        %v2147 = vadd.f32 %v2082, %v2146
        %2148 = vmatmul.f32.gmra.mxu0 %v1950
        %v2149 = vpop.f32.mrf.mxu0
        %v2150 = vadd.f32 %v2085, %v2149
        %2151 = vmatmul.f32.gmra.mxu0 %v1954
        %v2152 = vpop.f32.mrf.mxu0
        %v2153 = vadd.f32 %v2088, %v2152
        %2154 = vmatmul.f32.gmra.mxu0 %v1958
        %v2155 = vpop.f32.mrf.mxu0
        %v2156 = vadd.f32 %v2091, %v2155
        %2157 = vmatmul.f32.gmra.mxu0 %v1962
        %v2158 = vpop.f32.mrf.mxu0
        %v2159 = vadd.f32 %v2094, %v2158
        %2160 = vmatmul.f32.gmra.mxu0 %v1966
        %v2161 = vpop.f32.mrf.mxu0
        %v2162 = vadd.f32 %v2097, %v2161
        %2163 = vmatmul.f32.gmra.mxu0 %v1970
        %v2164 = vpop.f32.mrf.mxu0
        %v2165 = vadd.f32 %v2100, %v2164
        %2166 = vdwg.mxu0
        %2167 = vmatpush.msra.mxu0 %v2020
        %2168 = vmatpush.msra.mxu0 %v2019
        %2169 = vmatpush.msra.mxu0 %v2018
        %2170 = vmatpush.msra.mxu0 %v2017
        %2171 = vmatpush.msra.mxu0 %v2016
        %2172 = vmatpush.msra.mxu0 %v2015
        %2173 = vmatpush.msra.mxu0 %v2014
        %2174 = vmatpush.msra.mxu0 %v2013
        %2175 = vmatpush.msra.mxu0 %v2012
        %2176 = vmatpush.msra.mxu0 %v2011
        %2177 = vmatpush.msra.mxu0 %v2010
        %2178 = vmatpush.msra.mxu0 %v2009
        %2179 = vmatpush.msra.mxu0 %v2008
        %2180 = vmatpush.msra.mxu0 %v2007
        %2181 = vmatpush.msra.mxu0 %v2006
        %2182 = vmatpush.msra.mxu0 %v2005
        %2183 = vmatmul.f32.gmra.mxu0 %v1911
        %v2184 = vpop.f32.mrf.mxu0
        %v2185 = vadd.f32 %v2120, %v2184
        %2186 = vmatmul.f32.gmra.mxu0 %v1915
        %v2187 = vpop.f32.mrf.mxu0
        %v2188 = vadd.f32 %v2123, %v2187
        %2189 = vmatmul.f32.gmra.mxu0 %v1919
        %v2190 = vpop.f32.mrf.mxu0
        %v2191 = vadd.f32 %v2126, %v2190
        %2192 = vmatmul.f32.gmra.mxu0 %v1923
        %v2193 = vpop.f32.mrf.mxu0
        %v2194 = vadd.f32 %v2129, %v2193
        %2195 = vmatmul.f32.gmra.mxu0 %v1927
        %v2196 = vpop.f32.mrf.mxu0
        %v2197 = vadd.f32 %v2132, %v2196
        %2198 = vmatmul.f32.gmra.mxu0 %v1931
        %v2199 = vpop.f32.mrf.mxu0
        %v2200 = vadd.f32 %v2135, %v2199
        %2201 = vmatmul.f32.gmra.mxu0 %v1935
        %v2202 = vpop.f32.mrf.mxu0
        %v2203 = vadd.f32 %v2138, %v2202
        %2204 = vmatmul.f32.gmra.mxu0 %v1939
        %v2205 = vpop.f32.mrf.mxu0
        %v2206 = vadd.f32 %v2141, %v2205
        %2207 = vmatmul.f32.gmra.mxu0 %v1943
        %v2208 = vpop.f32.mrf.mxu0
        %v2209 = vadd.f32 %v2144, %v2208
        %2210 = vmatmul.f32.gmra.mxu0 %v1947
        %v2211 = vpop.f32.mrf.mxu0
        %v2212 = vadd.f32 %v2147, %v2211
        %2213 = vmatmul.f32.gmra.mxu0 %v1951
        %v2214 = vpop.f32.mrf.mxu0
        %v2215 = vadd.f32 %v2150, %v2214
        %2216 = vmatmul.f32.gmra.mxu0 %v1955
        %v2217 = vpop.f32.mrf.mxu0
        %v2218 = vadd.f32 %v2153, %v2217
        %2219 = vmatmul.f32.gmra.mxu0 %v1959
        %v2220 = vpop.f32.mrf.mxu0
        %v2221 = vadd.f32 %v2156, %v2220
        %2222 = vmatmul.f32.gmra.mxu0 %v1963
        %v2223 = vpop.f32.mrf.mxu0
        %v2224 = vadd.f32 %v2159, %v2223
        %2225 = vmatmul.f32.gmra.mxu0 %v1967
        %v2226 = vpop.f32.mrf.mxu0
        %v2227 = vadd.f32 %v2162, %v2226
        %2228 = vmatmul.f32.gmra.mxu0 %v1971
        %v2229 = vpop.f32.mrf.mxu0
        %v2230 = vadd.f32 %v2165, %v2229
        %2231 = vdwg.mxu0
        %2232 = vmatpush.msra.mxu0 %v2036
        %2233 = vmatpush.msra.mxu0 %v2035
        %2234 = vmatpush.msra.mxu0 %v2034
        %2235 = vmatpush.msra.mxu0 %v2033
        %2236 = vmatpush.msra.mxu0 %v2032
        %2237 = vmatpush.msra.mxu0 %v2031
        %2238 = vmatpush.msra.mxu0 %v2030
        %2239 = vmatpush.msra.mxu0 %v2029
        %2240 = vmatpush.msra.mxu0 %v2028
        %2241 = vmatpush.msra.mxu0 %v2027
        %2242 = vmatpush.msra.mxu0 %v2026
        %2243 = vmatpush.msra.mxu0 %v2025
        %2244 = vmatpush.msra.mxu0 %v2024
        %2245 = vmatpush.msra.mxu0 %v2023
        %2246 = vmatpush.msra.mxu0 %v2022
        %2247 = vmatpush.msra.mxu0 %v2021
        %2248 = vmatmul.f32.gmra.mxu0 %v1912
        %v2249 = vpop.f32.mrf.mxu0
        %v2250 = vadd.f32 %v2185, %v2249
        %2251 = vmatmul.f32.gmra.mxu0 %v1916
        %v2252 = vpop.f32.mrf.mxu0
        %v2253 = vadd.f32 %v2188, %v2252
        %2254 = vmatmul.f32.gmra.mxu0 %v1920
        %v2255 = vpop.f32.mrf.mxu0
        %v2256 = vadd.f32 %v2191, %v2255
        %2257 = vmatmul.f32.gmra.mxu0 %v1924
        %v2258 = vpop.f32.mrf.mxu0
        %v2259 = vadd.f32 %v2194, %v2258
        %2260 = vmatmul.f32.gmra.mxu0 %v1928
        %v2261 = vpop.f32.mrf.mxu0
        %v2262 = vadd.f32 %v2197, %v2261
        %2263 = vmatmul.f32.gmra.mxu0 %v1932
        %v2264 = vpop.f32.mrf.mxu0
        %v2265 = vadd.f32 %v2200, %v2264
        %2266 = vmatmul.f32.gmra.mxu0 %v1936
        %v2267 = vpop.f32.mrf.mxu0
        %v2268 = vadd.f32 %v2203, %v2267
        %2269 = vmatmul.f32.gmra.mxu0 %v1940
        %v2270 = vpop.f32.mrf.mxu0
        %v2271 = vadd.f32 %v2206, %v2270
        %2272 = vmatmul.f32.gmra.mxu0 %v1944
        %v2273 = vpop.f32.mrf.mxu0
        %v2274 = vadd.f32 %v2209, %v2273
        %2275 = vmatmul.f32.gmra.mxu0 %v1948
        %v2276 = vpop.f32.mrf.mxu0
        %v2277 = vadd.f32 %v2212, %v2276
        %2278 = vmatmul.f32.gmra.mxu0 %v1952
        %v2279 = vpop.f32.mrf.mxu0
        %v2280 = vadd.f32 %v2215, %v2279
        %2281 = vmatmul.f32.gmra.mxu0 %v1956
        %v2282 = vpop.f32.mrf.mxu0
        %v2283 = vadd.f32 %v2218, %v2282
        %2284 = vmatmul.f32.gmra.mxu0 %v1960
        %v2285 = vpop.f32.mrf.mxu0
        %v2286 = vadd.f32 %v2221, %v2285
        %2287 = vmatmul.f32.gmra.mxu0 %v1964
        %v2288 = vpop.f32.mrf.mxu0
        %v2289 = vadd.f32 %v2224, %v2288
        %2290 = vmatmul.f32.gmra.mxu0 %v1968
        %v2291 = vpop.f32.mrf.mxu0
        %v2292 = vadd.f32 %v2227, %v2291
        %2293 = vmatmul.f32.gmra.mxu0 %v1972
        %v2294 = vpop.f32.mrf.mxu0
        %v2295 = vadd.f32 %v2230, %v2294
        %2296 = vdwg.mxu0
        %v2297 = vmax.f32 %v2250, 1e-10
        %v2298 = vmax.f32 %v2253, 1e-10
        %v2299 = vmax.f32 %v2256, 1e-10
        %v2300 = vmax.f32 %v2259, 1e-10
        %v2301 = vmax.f32 %v2262, 1e-10
        %v2302 = vmax.f32 %v2265, 1e-10
        %v2303 = vmax.f32 %v2268, 1e-10
        %v2304 = vmax.f32 %v2271, 1e-10
        %v2305 = vmax.f32 %v2274, 1e-10
        %v2306 = vmax.f32 %v2277, 1e-10
        %v2307 = vmax.f32 %v2280, 1e-10
        %v2308 = vmax.f32 %v2283, 1e-10
        %v2309 = vmax.f32 %v2286, 1e-10
        %v2310 = vmax.f32 %v2289, 1e-10
        %v2311 = vmax.f32 %v2292, 1e-10
        %v2312 = vmax.f32 %v2295, 1e-10
        %v2313 = vlog2.pop %v2297
        %v2314 = vmul.f32 %v2313, 0.6931472
        %v2315 = vlog2.pop %v2298
        %v2316 = vmul.f32 %v2315, 0.6931472
        %v2317 = vlog2.pop %v2299
        %v2318 = vmul.f32 %v2317, 0.6931472
        %v2319 = vlog2.pop %v2300
        %v2320 = vmul.f32 %v2319, 0.6931472
        %v2321 = vlog2.pop %v2301
        %v2322 = vmul.f32 %v2321, 0.6931472
        %v2323 = vlog2.pop %v2302
        %v2324 = vmul.f32 %v2323, 0.6931472
        %v2325 = vlog2.pop %v2303
        %v2326 = vmul.f32 %v2325, 0.6931472
        %v2327 = vlog2.pop %v2304
        %v2328 = vmul.f32 %v2327, 0.6931472
        %v2329 = vlog2.pop %v2305
        %v2330 = vmul.f32 %v2329, 0.6931472
        %v2331 = vlog2.pop %v2306
        %v2332 = vmul.f32 %v2331, 0.6931472
        %v2333 = vlog2.pop %v2307
        %v2334 = vmul.f32 %v2333, 0.6931472
        %v2335 = vlog2.pop %v2308
        %v2336 = vmul.f32 %v2335, 0.6931472
        %v2337 = vlog2.pop %v2309
        %v2338 = vmul.f32 %v2337, 0.6931472
        %v2339 = vlog2.pop %v2310
        %v2340 = vmul.f32 %v2339, 0.6931472
        %v2341 = vlog2.pop %v2311
        %v2342 = vmul.f32 %v2341, 0.6931472
        %v2343 = vlog2.pop %v2312
        %v2344 = vmul.f32 %v2343, 0.6931472
        %v2345 = vmul.f32 %v2314, 0.4342945
        %v2346 = vmul.f32 %v2316, 0.4342945
        %v2347 = vmul.f32 %v2318, 0.4342945
        %v2348 = vmul.f32 %v2320, 0.4342945
        %v2349 = vmul.f32 %v2322, 0.4342945
        %v2350 = vmul.f32 %v2324, 0.4342945
        %v2351 = vmul.f32 %v2326, 0.4342945
        %v2352 = vmul.f32 %v2328, 0.4342945
        %v2353 = vmul.f32 %v2330, 0.4342945
        %v2354 = vmul.f32 %v2332, 0.4342945
        %v2355 = vmul.f32 %v2334, 0.4342945
        %v2356 = vmul.f32 %v2336, 0.4342945
        %v2357 = vmul.f32 %v2338, 0.4342945
        %v2358 = vmul.f32 %v2340, 0.4342945
        %v2359 = vmul.f32 %v2342, 0.4342945
        %v2360 = vmul.f32 %v2344, 0.4342945
        %v2361 = vmul.f32 %v2345, 10.0
        %v2362 = vmul.f32 %v2346, 10.0
        %v2363 = vmul.f32 %v2347, 10.0
        %v2364 = vmul.f32 %v2348, 10.0
        %v2365 = vmul.f32 %v2349, 10.0
        %v2366 = vmul.f32 %v2350, 10.0
        %v2367 = vmul.f32 %v2351, 10.0
        %v2368 = vmul.f32 %v2352, 10.0
        %v2369 = vmul.f32 %v2353, 10.0
        %v2370 = vmul.f32 %v2354, 10.0
        %v2371 = vmul.f32 %v2355, 10.0
        %v2372 = vmul.f32 %v2356, 10.0
        %v2373 = vmul.f32 %v2357, 10.0
        %v2374 = vmul.f32 %v2358, 10.0
        %v2375 = vmul.f32 %v2359, 10.0
        %v2376 = vmul.f32 %v2360, 10.0
        %2377 = vxpose.xlu0.b32.start [1/16] %v2361, 128
        %2378 = vxpose.xlu0.b32.cont [2/16] %v2362, 128
        %2379 = vxpose.xlu0.b32.cont [3/16] %v2363, 128
        %2380 = vxpose.xlu0.b32.cont [4/16] %v2364, 128
        %2381 = vxpose.xlu0.b32.cont [5/16] %v2365, 128
        %2382 = vxpose.xlu0.b32.cont [6/16] %v2366, 128
        %2383 = vxpose.xlu0.b32.cont [7/16] %v2367, 128
        %2384 = vxpose.xlu0.b32.cont [8/16] %v2368, 128
        %2385 = vxpose.xlu0.b32.cont [9/16] %v2369, 128
        %2386 = vxpose.xlu0.b32.cont [10/16] %v2370, 128
        %2387 = vxpose.xlu0.b32.cont [11/16] %v2371, 128
        %2388 = vxpose.xlu0.b32.cont [12/16] %v2372, 128
        %2389 = vxpose.xlu0.b32.cont [13/16] %v2373, 128
        %2390 = vxpose.xlu0.b32.cont [14/16] %v2374, 128
        %2391 = vxpose.xlu0.b32.cont [15/16] %v2375, 128
        %2392 = vxpose.xlu0.b32.end [16/16] %v2376, 128
        %v2393 = vpop.trf.xlu0
        %v2394 = vpop.trf.xlu0
        %v2395 = vpop.trf.xlu0
        %v2396 = vpop.trf.xlu0
        %v2397 = vpop.trf.xlu0
        %v2398 = vpop.trf.xlu0
        %v2399 = vpop.trf.xlu0
        %v2400 = vpop.trf.xlu0
        %v2401 = vpop.trf.xlu0
        %v2402 = vpop.trf.xlu0
        %v2403 = vpop.trf.xlu0
        %v2404 = vpop.trf.xlu0
        %v2405 = vpop.trf.xlu0
        %v2406 = vpop.trf.xlu0
        %v2407 = vpop.trf.xlu0
        %v2408 = vpop.trf.xlu0
        %2409 = vst [vmem:[%s177] sm:$0xff] %v2393
        %2410 = vst [vmem:[%s177 + $0x8] sm:$0xff] %v2394
        %2411 = vst [vmem:[%s177 + $0x10] sm:$0xff] %v2395
        %2412 = vst [vmem:[%s177 + $0x18] sm:$0xff] %v2396
        %2413 = vst [vmem:[%s177 + $0x20] sm:$0xff] %v2397
        %2414 = vst [vmem:[%s177 + $0x28] sm:$0xff] %v2398
        %2415 = vst [vmem:[%s177 + $0x30] sm:$0xff] %v2399
        %2416 = vst [vmem:[%s177 + $0x38] sm:$0xff] %v2400
        %2417 = vst [vmem:[%s177 + $0x40] sm:$0xff] %v2401
        %2418 = vst [vmem:[%s177 + $0x48] sm:$0xff] %v2402
        %2419 = vst [vmem:[%s177 + $0x50] sm:$0xff] %v2403
        %2420 = vst [vmem:[%s177 + $0x58] sm:$0xff] %v2404
        %2421 = vst [vmem:[%s177 + $0x60] sm:$0xff] %v2405
        %2422 = vst [vmem:[%s177 + $0x68] sm:$0xff] %v2406
        %2423 = vst [vmem:[%s177 + $0x70] sm:$0xff] %v2407
        %2424 = vst [vmem:[%s177 + $0x78] sm:$0xff] %v2408
        %s2425 = sand.u32 %s90, 1
        %s2426 = sand.u32 %s90, 1
        %s2427 = smul.addr %s2426, 128
        %s2428 = scalar_lea.vmem [#allocation2], %s2427
        // Predicated region
        $region33: #{mel_spectrogram_extractor.1} parent=31 // pred_check
          %p2429 = pneg %p100
        $region34: #{mel_spectrogram_extractor.1} parent=31 // pred_check_branch
          %2431 = sbr.rel (%p2429) target = $region36
        $region35: #{mel_spectrogram_extractor.1} parent=31 // pred_region
          %s2432 = smul.addr %s14, 8
          %s2433 = scalar_lea.vmem %s3, %s2432
          // Predicated region
          $region37: #{mel_spectrogram_extractor.1} parent=35 // pred_check
            _
          $region38: #{mel_spectrogram_extractor.1} parent=35 // pred_check_branch
            %2435 = sbr.rel (0) target = $region40
          $region39: #{mel_spectrogram_extractor.1} parent=35 // pred_region
            // Predicated region
            $region41: #{mel_spectrogram_extractor.1} parent=39 // pred_check
              _
            $region42: #{mel_spectrogram_extractor.1} parent=39 // pred_check_branch
              %2437 = sbr.rel (0) target = $region44
            $region43: #{mel_spectrogram_extractor.1} parent=39 // pred_region
              // Predicated region
              $region56: #{mel_spectrogram_extractor.1} parent=43 // pred_check
                _
              $region57: #{mel_spectrogram_extractor.1} parent=43 // pred_check_branch
                %2483 = sbr.rel (0) target = $region59
              $region58: #{mel_spectrogram_extractor.1} parent=43 // pred_region
                loop: start=0, step=1, limit=1
                $region60: #{mel_spectrogram_extractor.1} parent=58 // loop_pre_header
                  _
                $region61: #{mel_spectrogram_extractor.1} parent=58 // loop_header
                  %s2485 = sphi 0, %s2489
                  %p2486 = scmp.ge.s32.totalorder %s2485, 1
                  %s2490 = sphi %s2428, %s2428
                  %s2491 = sphi %s2433, %s2433
                $region62: #{mel_spectrogram_extractor.1} parent=58 // loop_header_branch
                  %2488 = sbr.rel (%p2486) target = $region66
                $region63: #{mel_spectrogram_extractor.1} parent=58 // loop_body
                  %v2492 = vld [vmem:[%s2490] sm:$0xff]
                  %2493 = vst [vmem:[%s2491] sm:$0xff] %v2492
                  %v2494 = vld [vmem:[%s2490 + $0x8] sm:$0xff]
                  %2495 = vst [vmem:[%s2491 + $0x10] sm:$0xff] %v2494
                  %v2496 = vld [vmem:[%s2490 + $0x10] sm:$0xff]
                  %2497 = vst [vmem:[%s2491 + $0x20] sm:$0xff] %v2496
                  %v2498 = vld [vmem:[%s2490 + $0x18] sm:$0xff]
                  %2499 = vst [vmem:[%s2491 + $0x30] sm:$0xff] %v2498
                  %v2500 = vld [vmem:[%s2490 + $0x20] sm:$0xff]
                  %2501 = vst [vmem:[%s2491 + $0x40] sm:$0xff] %v2500
                  %v2502 = vld [vmem:[%s2490 + $0x28] sm:$0xff]
                  %2503 = vst [vmem:[%s2491 + $0x50] sm:$0xff] %v2502
                  %v2504 = vld [vmem:[%s2490 + $0x30] sm:$0xff]
                  %2505 = vst [vmem:[%s2491 + $0x60] sm:$0xff] %v2504
                  %v2506 = vld [vmem:[%s2490 + $0x38] sm:$0xff]
                  %2507 = vst [vmem:[%s2491 + $0x70] sm:$0xff] %v2506
                  %v2508 = vld [vmem:[%s2490 + $0x40] sm:$0xff]
                  %2509 = vst [vmem:[%s2491 + $0x80] sm:$0xff] %v2508
                  %v2510 = vld [vmem:[%s2490 + $0x48] sm:$0xff]
                  %2511 = vst [vmem:[%s2491 + $0x90] sm:$0xff] %v2510
                  %v2512 = vld [vmem:[%s2490 + $0x50] sm:$0xff]
                  %2513 = vst [vmem:[%s2491 + $0xa0] sm:$0xff] %v2512
                  %v2514 = vld [vmem:[%s2490 + $0x58] sm:$0xff]
                  %2515 = vst [vmem:[%s2491 + $0xb0] sm:$0xff] %v2514
                  %v2516 = vld [vmem:[%s2490 + $0x60] sm:$0xff]
                  %2517 = vst [vmem:[%s2491 + $0xc0] sm:$0xff] %v2516
                  %v2518 = vld [vmem:[%s2490 + $0x68] sm:$0xff]
                  %2519 = vst [vmem:[%s2491 + $0xd0] sm:$0xff] %v2518
                  %v2520 = vld [vmem:[%s2490 + $0x70] sm:$0xff]
                  %2521 = vst [vmem:[%s2491 + $0xe0] sm:$0xff] %v2520
                  %v2522 = vld [vmem:[%s2490 + $0x78] sm:$0xff]
                  %2523 = vst [vmem:[%s2491 + $0xf0] sm:$0xff] %v2522
                $region64: #{mel_spectrogram_extractor.1} parent=58 // loop_footer
                  %s2489 = sadd.s32 1, %s2485
                $region65: #{mel_spectrogram_extractor.1} parent=58 // loop_footer_branch
                  %2484 = sbr.rel target = $region61
                $region66: #{mel_spectrogram_extractor.1} parent=58 // loop_exit
                  _
              $region59: #{mel_spectrogram_extractor.1} parent=43 // pred_fallthru
                _
              // Predicated region
              $region67: #{mel_spectrogram_extractor.1} parent=43 // pred_check
                _
              $region68: #{mel_spectrogram_extractor.1} parent=43 // pred_check_branch
                %2525 = sbr.rel target = $region70
              $region69: #{mel_spectrogram_extractor.1} parent=43 // pred_region
                _
              $region70: #{mel_spectrogram_extractor.1} parent=43 // pred_fallthru
                _
            $region44: #{mel_spectrogram_extractor.1} parent=39 // pred_fallthru
              _
            // Predicated region
            $region45: #{mel_spectrogram_extractor.1} parent=39 // pred_check
              _
            $region46: #{mel_spectrogram_extractor.1} parent=39 // pred_check_branch
              %2439 = sbr.rel target = $region48
            $region47: #{mel_spectrogram_extractor.1} parent=39 // pred_region
              %s2441 = ssub.s32 256, 1
              loop: start=0, step=1, limit=1
              $region49: #{mel_spectrogram_extractor.1} parent=47 // loop_pre_header
                _
              $region50: #{mel_spectrogram_extractor.1} parent=47 // loop_header
                %s2443 = sphi 0, %s2447
                %p2444 = scmp.ge.s32.totalorder %s2443, 1
                %s2448 = sphi %s2428, %s2428
                %s2449 = sphi %s2433, %s2433
              $region51: #{mel_spectrogram_extractor.1} parent=47 // loop_header_branch
                %2446 = sbr.rel (%p2444) target = $region55
              $region52: #{mel_spectrogram_extractor.1} parent=47 // loop_body
                %v2450 = vld [vmem:[%s2448] sm:%s2441]
                %2451 = vst [vmem:[%s2449] sm:%s2441] %v2450
                %v2452 = vld [vmem:[%s2448 + $0x8] sm:%s2441]
                %2453 = vst [vmem:[%s2449 + $0x10] sm:%s2441] %v2452
                %v2454 = vld [vmem:[%s2448 + $0x10] sm:%s2441]
                %2455 = vst [vmem:[%s2449 + $0x20] sm:%s2441] %v2454
                %v2456 = vld [vmem:[%s2448 + $0x18] sm:%s2441]
                %2457 = vst [vmem:[%s2449 + $0x30] sm:%s2441] %v2456
                %v2458 = vld [vmem:[%s2448 + $0x20] sm:%s2441]
                %2459 = vst [vmem:[%s2449 + $0x40] sm:%s2441] %v2458
                %v2460 = vld [vmem:[%s2448 + $0x28] sm:%s2441]
                %2461 = vst [vmem:[%s2449 + $0x50] sm:%s2441] %v2460
                %v2462 = vld [vmem:[%s2448 + $0x30] sm:%s2441]
                %2463 = vst [vmem:[%s2449 + $0x60] sm:%s2441] %v2462
                %v2464 = vld [vmem:[%s2448 + $0x38] sm:%s2441]
                %2465 = vst [vmem:[%s2449 + $0x70] sm:%s2441] %v2464
                %v2466 = vld [vmem:[%s2448 + $0x40] sm:%s2441]
                %2467 = vst [vmem:[%s2449 + $0x80] sm:%s2441] %v2466
                %v2468 = vld [vmem:[%s2448 + $0x48] sm:%s2441]
                %2469 = vst [vmem:[%s2449 + $0x90] sm:%s2441] %v2468
                %v2470 = vld [vmem:[%s2448 + $0x50] sm:%s2441]
                %2471 = vst [vmem:[%s2449 + $0xa0] sm:%s2441] %v2470
                %v2472 = vld [vmem:[%s2448 + $0x58] sm:%s2441]
                %2473 = vst [vmem:[%s2449 + $0xb0] sm:%s2441] %v2472
                %v2474 = vld [vmem:[%s2448 + $0x60] sm:%s2441]
                %2475 = vst [vmem:[%s2449 + $0xc0] sm:%s2441] %v2474
                %v2476 = vld [vmem:[%s2448 + $0x68] sm:%s2441]
                %2477 = vst [vmem:[%s2449 + $0xd0] sm:%s2441] %v2476
                %v2478 = vld [vmem:[%s2448 + $0x70] sm:%s2441]
                %2479 = vst [vmem:[%s2449 + $0xe0] sm:%s2441] %v2478
                %v2480 = vld [vmem:[%s2448 + $0x78] sm:%s2441]
                %2481 = vst [vmem:[%s2449 + $0xf0] sm:%s2441] %v2480
              $region53: #{mel_spectrogram_extractor.1} parent=47 // loop_footer
                %s2447 = sadd.s32 1, %s2443
              $region54: #{mel_spectrogram_extractor.1} parent=47 // loop_footer_branch
                %2442 = sbr.rel target = $region50
              $region55: #{mel_spectrogram_extractor.1} parent=47 // loop_exit
                _
            $region48: #{mel_spectrogram_extractor.1} parent=39 // pred_fallthru
              _
          $region40: #{mel_spectrogram_extractor.1} parent=35 // pred_fallthru
            _
          %2526 = vnop
        $region36: #{mel_spectrogram_extractor.1} parent=31 // pred_fallthru
          _
      $region32: #{mel_spectrogram_extractor.1} parent=5 // pred_fallthru
        _
      %p2527 = scmp.le.s32.totalorder 2, %s9
      // Predicated region
      $region71: #{mel_spectrogram_extractor.1} parent=5 // pred_check
        %p2528 = pneg %p2527
      $region72: #{mel_spectrogram_extractor.1} parent=5 // pred_check_branch
        %2530 = sbr.rel (%p2528) target = $region74
      $region73: #{mel_spectrogram_extractor.1} parent=5 // pred_region
        %s2531 = ssub.s32 %s9, 2
        // Predicated region
        $region75: #{mel_spectrogram_extractor.1} parent=73 // pred_check
          %p2532 = pneg %p106
        $region76: #{mel_spectrogram_extractor.1} parent=73 // pred_check_branch
          %2534 = sbr.rel (%p2532) target = $region78
        $region77: #{mel_spectrogram_extractor.1} parent=73 // pred_region
          %s2535 = sand.u32 %s91, 1
          %s2536 = sand.u32 %s91, 1
          %s2537 = smul.addr %s2536, 128
          %s2538 = scalar_lea.vmem [#allocation2], %s2537
        $region78: #{mel_spectrogram_extractor.1} parent=73 // pred_fallthru
          _
      $region74: #{mel_spectrogram_extractor.1} parent=5 // pred_fallthru
        _
    $region6: #{mel_spectrogram_extractor.1} parent=1 // loop_footer
      %s13 = sadd.s32 1, %s9
    $region7: #{mel_spectrogram_extractor.1} parent=1 // loop_footer_branch
      %8 = sbr.rel target = $region3
    $region8: #{mel_spectrogram_extractor.1} parent=1 // loop_exit
      _

</llo_original>
